<compile_context>
chip_gen: v7x
topology: tpu7x:2x2x1
jax: 0.10.0
libtpu: 0.0.40
codegen_flags: <defaults>
</compile_context>

<pallas_src>
import functools

import numpy as np
import jax
import jax.numpy as jnp
from jax.experimental import pallas as pl
from jax.experimental.pallas import tpu as pltpu

LN_EPS = 1e-5  # PyTorch nn.LayerNorm default
_SQRT_2_OVER_PI = 0.7978845608028654


# ----------------------------------------------------------------------------
# Small helpers
# ----------------------------------------------------------------------------
def _round_up(x, m):
    return (x + m - 1) // m * m


def _nbytes(shape, dtype):
    return int(np.prod(shape)) * int(np.dtype(dtype).itemsize)


@functools.lru_cache(maxsize=None)
def _vmem_cap_bytes():
    # Cap per generation: 80% of physical VMEM (v5e/v6e 128 MiB, v7x 64 MiB).
    cap = 64 << 20  # conservative default if the query is unavailable
    try:
        cap = int(pltpu.get_tpu_info().vmem_capacity_bytes)
    except Exception:
        pass
    return int(cap * 0.8)


def _vmem_limit(block_bytes):
    need = 2 * int(block_bytes) + (4 << 20)   # double buffering + headroom
    return int(min(max(need, 32 << 20), _vmem_cap_bytes()))


def _gelu(x):
    # TODO(synk): tanh-approx GELU (1 EUP tanh) instead of exact erf (~1e-3 rel).
    return 0.5 * x * (1.0 + jnp.tanh(_SQRT_2_OVER_PI * (x + 0.044715 * x * x * x)))


def _row_tile(R, bytes_per_row, target=3 << 20):
    """Row-tile size: ~3 MiB blocks, >=2 grid steps for megacore when possible."""
    br = int(target // max(int(bytes_per_row), 1))
    br = max(8, min(br, 2048))
    if R >= 512:
        br = min(br, max(256, _round_up(pl.cdiv(R, 2), 8)))
    br = min(br, _round_up(R, 8))
    return _round_up(br, 8)


# ----------------------------------------------------------------------------
# Kernel 1: (optional LayerNorm) + Linear (+ GELU) (+ fused residual add)
# ----------------------------------------------------------------------------
def _linear_kernel(*refs, ln, act, res):
    it = iter(refs)
    x_ref = next(it)
    r_ref = next(it) if res else None
    g_ref = next(it) if ln else None
    be_ref = next(it) if ln else None
    w_ref = next(it)
    b_ref = next(it)
    o_ref = next(it)
    if ln:
        xv = x_ref[...].astype(jnp.float32)
        mu = jnp.mean(xv, axis=-1, keepdims=True)
        var = jnp.mean(jnp.square(xv - mu), axis=-1, keepdims=True)
        xn = (xv - mu) * jax.lax.rsqrt(var + LN_EPS)
        xin = (xn * g_ref[...] + be_ref[...]).astype(jnp.bfloat16)
    else:
        xin = x_ref[...].astype(jnp.bfloat16)
    y = jnp.dot(xin, w_ref[...], preferred_element_type=jnp.float32) + b_ref[...]
    if act:
        y = _gelu(y)
    if res:
        y = y + r_ref[...].astype(jnp.float32)
    o_ref[...] = y.astype(o_ref.dtype)


def linear(x, w, b, *, gamma=None, beta=None, act=False, res=None,
           out_dtype=jnp.float32):
    """y = act(LN(x) @ w + b) [+ res].  x: (R, Cin) -> (R, Cout)."""
    R, Cin = x.shape
    Cout = w.shape[1]
    ln = gamma is not None
    have_res = res is not None

    bytes_per_row = (Cin * x.dtype.itemsize
                     + Cout * (np.dtype(out_dtype).itemsize + 4)
                     + (Cout * res.dtype.itemsize if have_res else 0)
                     + (Cin * 4 if ln else 0))
    br = _row_tile(R, bytes_per_row)
    Rp = _round_up(R, br)
    if Rp != R:
        x = jnp.pad(x, ((0, Rp - R), (0, 0)))
        if have_res:
            res = jnp.pad(res, ((0, Rp - R), (0, 0)))

    def full(shape):
        return pl.BlockSpec(shape, lambda i: tuple(0 for _ in shape))

    args, in_specs = [x], [pl.BlockSpec((br, Cin), lambda i: (i, 0))]
    if have_res:
        args.append(res)
        in_specs.append(pl.BlockSpec((br, Cout), lambda i: (i, 0)))
    if ln:
        args += [gamma.reshape(1, Cin).astype(jnp.float32),
                 beta.reshape(1, Cin).astype(jnp.float32)]
        in_specs += [full((1, Cin)), full((1, Cin))]
    args += [w.astype(jnp.bfloat16), b.reshape(1, Cout).astype(jnp.float32)]
    in_specs += [full((Cin, Cout)), full((1, Cout))]

    blk = (_nbytes((br, Cin), x.dtype) + _nbytes((Cin, Cout), jnp.bfloat16)
           + _nbytes((br, Cout), out_dtype) + 2 * _nbytes((br, Cout), jnp.float32)
           + (_nbytes((br, Cin), jnp.float32) if ln else 0))
    out = pl.pallas_call(
        functools.partial(_linear_kernel, ln=ln, act=act, res=have_res),
        out_shape=jax.ShapeDtypeStruct((Rp, Cout), out_dtype),
        grid=(Rp // br,),
        in_specs=in_specs,
        out_specs=pl.BlockSpec((br, Cout), lambda i: (i, 0)),
        compiler_params=pltpu.CompilerParams(
            dimension_semantics=("parallel",),
            vmem_limit_bytes=_vmem_limit(blk)),
    )(*args)
    return out[:R] if Rp != R else out


# ----------------------------------------------------------------------------
# Kernel 2: fused LayerNorm + Wqkv, output split as (3, R, C) = [q, k, v]
# ----------------------------------------------------------------------------
def _ln_qkv_kernel(x_ref, g_ref, be_ref, wq_ref, wk_ref, wv_ref, b_ref, o_ref):
    xv = x_ref[...].astype(jnp.float32)
    mu = jnp.mean(xv, axis=-1, keepdims=True)
    var = jnp.mean(jnp.square(xv - mu), axis=-1, keepdims=True)
    xn = (xv - mu) * jax.lax.rsqrt(var + LN_EPS)
    xb = (xn * g_ref[...] + be_ref[...]).astype(jnp.bfloat16)
    bv = b_ref[...]                                          # (3, C) f32
    for s, w_ref in enumerate((wq_ref, wk_ref, wv_ref)):
        y = jnp.dot(xb, w_ref[...], preferred_element_type=jnp.float32) + bv[s]
        o_ref[s] = y.astype(o_ref.dtype)


def ln_qkv_linear(x, w, b, gamma, beta, *, out_dtype=jnp.bfloat16):
    """x: (R, C), w: (C, 3C), b: (3C,).  Returns (3, R, C) = split(LN(x)@w + b)."""
    R, Cin = x.shape
    C = w.shape[1] // 3
    wb = w.astype(jnp.bfloat16)
    wq, wk, wv = wb[:, :C], wb[:, C:2 * C], wb[:, 2 * C:]
    b3 = b.reshape(3, C).astype(jnp.float32)

    bytes_per_row = (Cin * (x.dtype.itemsize + 4)
                     + 3 * C * (np.dtype(out_dtype).itemsize + 4))
    br = _row_tile(R, bytes_per_row)
    Rp = _round_up(R, br)
    if Rp != R:
        x = jnp.pad(x, ((0, Rp - R), (0, 0)))

    def full(shape):
        return pl.BlockSpec(shape, lambda i: tuple(0 for _ in shape))

    blk = (_nbytes((br, Cin), x.dtype) + _nbytes((br, Cin), jnp.float32)
           + 3 * _nbytes((Cin, C), jnp.bfloat16)
           + _nbytes((3, br, C), out_dtype) + _nbytes((br, C), jnp.float32))
    out = pl.pallas_call(
        _ln_qkv_kernel,
        out_shape=jax.ShapeDtypeStruct((3, Rp, C), out_dtype),
        grid=(Rp // br,),
        in_specs=[pl.BlockSpec((br, Cin), lambda i: (i, 0)),
                  full((1, Cin)), full((1, Cin)),
                  full((Cin, C)), full((Cin, C)), full((Cin, C)),
                  full((3, C))],
        out_specs=pl.BlockSpec((3, br, C), lambda i: (0, i, 0)),
        compiler_params=pltpu.CompilerParams(
            dimension_semantics=("parallel",),
            vmem_limit_bytes=_vmem_limit(blk)),
    )(x, gamma.reshape(1, Cin).astype(jnp.float32),
      beta.reshape(1, Cin).astype(jnp.float32), wq, wk, wv, b3)
    return out[:, :R] if Rp != R else out


# ----------------------------------------------------------------------------
# Kernel 3: depthwise KxK "same" conv + GELU (+ fused x + gelu(dw(x))).
# Halo handled in-kernel (no jnp.pad); the v plane of the packed qkv tensor is
# read directly via the leading-axis index_map (no slice materialization).
# ----------------------------------------------------------------------------
def _dwconv_kernel(x_ref, w_ref, b_ref, o_ref, *, H, W, K, add_input):
    pad = (K - 1) // 2
    CT = o_ref.shape[-1]
    wv = w_ref[...].astype(jnp.float32)                      # (K, K, CT)
    bv = b_ref[...].astype(jnp.float32)                      # (1, CT)
    xv = x_ref[0, 0].astype(jnp.float32)                     # (H, W, CT)
    col = jax.lax.broadcasted_iota(jnp.int32, (1, W, 1), 1)
    # column-validity masks per horizontal tap (hoisted, folded into tap weight)
    cmask = [((col + (kj - pad) >= 0) & (col + (kj - pad) < W)).astype(jnp.float32)
             for kj in range(K)]
    acc = jnp.zeros((H, W, CT), jnp.float32)
    for ki in range(K):
        di = ki - pad
        if di > 0:        # shifted[y] = x[y + di], zero rows past the bottom
            sh = jnp.concatenate(
                [xv[di:], jnp.zeros((di, W, CT), jnp.float32)], axis=0)
        elif di < 0:      # zero rows above the top
            sh = jnp.concatenate(
                [jnp.zeros((-di, W, CT), jnp.float32), xv[:H + di]], axis=0)
        else:
            sh = xv
        for kj in range(K):
            dj = kj - pad
            # XLU sublane rotation (free slot) instead of an unaligned slice.
            rolled = pltpu.roll(sh, shift=(-dj) % W, axis=1) if dj != 0 else sh
            acc = acc + rolled * (cmask[kj] * wv[ki, kj])
    y = _gelu(acc + bv)
    if add_input:
        y = y + xv                                           # x + gelu(dwconv(x))
    o_ref[0] = y.astype(o_ref.dtype)


def dwconv_gelu(x, w, b, *, sel=0, add_input=False, out_dtype=jnp.float32):
    """Depthwise KxK 'same' conv + GELU over plane `sel` of x's leading axis.

    x: (B, H, W, Cd) or (S, B, H, W, Cd); w: (K, K, Cd); b: (Cd,).
    Returns (B, H, W, Cd) = gelu(dwconv(x)+b) [+ x if add_input]."""
    if x.ndim == 4:
        x = x.reshape((1,) + x.shape)
    _, B, H, W, Cd = x.shape
    K = w.shape[0]
    CT = 128 if (Cd > 128 and Cd % 128 == 0) else Cd
    nct = Cd // CT

    kern = functools.partial(_dwconv_kernel, H=H, W=W, K=K, add_input=add_input)
    blk = (_nbytes((H, W, CT), x.dtype) + _nbytes((H, W, CT), out_dtype)
           + 4 * _nbytes((H, W, CT), jnp.float32))
    # TODO(synk): add an H-row tiling axis (with halo) so there are >=2 parallel
    #             grid steps even when B == 1 and Cd <= 128 (v7x megacore).
    return pl.pallas_call(
        kern,
        out_shape=jax.ShapeDtypeStruct((B, H, W, Cd), out_dtype),
        grid=(B, nct),
        in_specs=[
            pl.BlockSpec((1, 1, H, W, CT), lambda ib, t: (sel, ib, 0, 0, t)),
            pl.BlockSpec((K, K, CT), lambda ib, t: (0, 0, t)),
            pl.BlockSpec((1, CT), lambda ib, t: (0, t)),
        ],
        out_specs=pl.BlockSpec((1, H, W, CT), lambda ib, t: (ib, 0, 0, t)),
        compiler_params=pltpu.CompilerParams(
            dimension_semantics=("parallel", "parallel"),
            vmem_limit_bytes=_vmem_limit(blk)),
    )(x, w, b.reshape(1, Cd))


# ----------------------------------------------------------------------------
# Kernel 4: window attention (dense PFA path).
# One grid step = one (batch, window-row) slab; fori_loop over windows,
# heads batched via leading-batch dot_generals; everything bf16 except
# accumulation / softmax stats.
# ----------------------------------------------------------------------------
def _win_attn_kernel(q_ref, k_ref, v_ref, vl_ref, bias_ref, o_ref, attn_ref, *,
                     nh, ws, nww, scale, per_window_bias):
    C = o_ref.shape[-1]
    hd = C // nh
    n = ws * ws

    def heads(ref, col):
        xw = ref[0, 0, :, pl.ds(col, ws), :]                 # (ws, ws, C) bf16
        xw = xw.reshape(n, C).reshape(n, nh, hd)
        return jnp.transpose(xw, (1, 0, 2))                  # (nh, n, hd) bf16

    def body(j, carry):
        col = pl.multiple_of(j * ws, ws)
        q = heads(q_ref, col)
        k = heads(k_ref, col)
        v = heads(v_ref, col)
        vlw = vl_ref[0, :, pl.ds(col, ws), :].reshape(n, C)  # (n, C) bf16

        s = jax.lax.dot_general(q, k, (((2,), (2,)), ((0,), (0,))),
                                preferred_element_type=jnp.float32) * scale
        bias = bias_ref[j if per_window_bias else 0].astype(jnp.float32)
        s = s + bias                                          # (nh, n, n) f32
        m = jnp.max(s, axis=-1, keepdims=True)
        e = jnp.exp(s - m)
        p = e * pl.reciprocal(jnp.sum(e, axis=-1, keepdims=True), approx=True)
        attn_ref[j] = p                                       # pfa_values

        o = jax.lax.dot_general(p.astype(jnp.bfloat16), v,
                                (((2,), (1,)), ((0,), (0,))),
                                preferred_element_type=jnp.float32)  # (nh, n, hd)
        ow = jnp.transpose(o, (1, 0, 2)).reshape(n, C) + vlw.astype(jnp.float32)
        o_ref[0, :, pl.ds(col, ws), :] = ow.reshape(ws, ws, C).astype(o_ref.dtype)
        return carry

    jax.lax.fori_loop(0, nww, body, 0)


def window_attention(qkv3_sp, vl_sp, bias, *, nh, ws, scale, per_window_bias,
                     out_dtype=jnp.float32):
    """qkv3_sp: (3,B,H,W,C) [q,k,v]; vl_sp: (B,H,W,C); bias: (1 or nw, NH, N, N).
    Returns (o: (B,H,W,C) in spatial order, attn: (B*nw, NH, N, N) f32)."""
    _, B, H, W, C = qkv3_sp.shape
    nwh, nww = H // ws, W // ws
    n = ws * ws
    kern = functools.partial(_win_attn_kernel, nh=nh, ws=ws, nww=nww, scale=scale,
                             per_window_bias=per_window_bias)

    def qkv_spec(idx):
        return pl.BlockSpec((1, 1, ws, W, C),
                            lambda g, idx=idx: (idx, g // nwh, g % nwh, 0, 0))

    vl_spec = pl.BlockSpec((1, ws, W, C), lambda g: (g // nwh, g % nwh, 0, 0))
    o_spec = pl.BlockSpec((1, ws, W, C), lambda g: (g // nwh, g % nwh, 0, 0))
    attn_spec = pl.BlockSpec((nww, nh, n, n), lambda g: (g, 0, 0, 0))
    if per_window_bias:
        bias_spec = pl.BlockSpec((nww, nh, n, n), lambda g: (g % nwh, 0, 0, 0))
        nbias = nww
    else:
        bias_spec = pl.BlockSpec((1, nh, n, n), lambda g: (0, 0, 0, 0))
        nbias = 1

    blk = (3 * _nbytes((ws, W, C), qkv3_sp.dtype)
           + 2 * _nbytes((ws, W, C), vl_sp.dtype)
           + _nbytes((nbias, nh, n, n), bias.dtype)
           + _nbytes((nww, nh, n, n), jnp.float32)
           + 3 * _nbytes((nh, n, n), jnp.float32))
    out, attn = pl.pallas_call(
        kern,
        out_shape=(jax.ShapeDtypeStruct((B, H, W, C), out_dtype),
                   jax.ShapeDtypeStruct((B * nwh * nww, nh, n, n), jnp.float32)),
        grid=(B * nwh,),
        in_specs=[qkv_spec(0), qkv_spec(1), qkv_spec(2), vl_spec, bias_spec],
        out_specs=(o_spec, attn_spec),
        compiler_params=pltpu.CompilerParams(
            dimension_semantics=("parallel",),
            vmem_limit_bytes=_vmem_limit(blk)),
    )(qkv3_sp, qkv3_sp, qkv3_sp, vl_sp, bias)
    return out, attn


# ----------------------------------------------------------------------------
# Glue: relative position index, params
# ----------------------------------------------------------------------------
def relative_position_index(ws):
    coords = np.stack(np.meshgrid(np.arange(ws), np.arange(ws), indexing="ij"))
    coords_flat = coords.reshape(2, -1)
    rel = coords_flat[:, :, None] - coords_flat[:, None, :]
    rel = rel.transpose(1, 2, 0).astype(np.int64)
    rel[:, :, 0] += ws - 1
    rel[:, :, 1] += ws - 1
    rel[:, :, 0] *= 2 * ws - 1
    return jnp.asarray(rel.sum(-1), dtype=jnp.int32)


def init_params(key, dim, num_heads, window_size, kernel_size, mlp_ratio):
    hidden = int(dim * mlp_ratio)
    ks = jax.random.split(key, 12)
    nrm = lambda k, shape, std: jax.random.normal(k, shape, jnp.float32) * std
    p = {}
    p["ln1_g"] = jnp.ones((dim,), jnp.float32)
    p["ln1_b"] = jnp.zeros((dim,), jnp.float32)
    p["ln2_g"] = jnp.ones((dim,), jnp.float32)
    p["ln2_b"] = jnp.zeros((dim,), jnp.float32)
    p["wqkv_w"] = nrm(ks[0], (dim, 3 * dim), 0.02)
    p["wqkv_b"] = jnp.zeros((3 * dim,), jnp.float32)
    p["lepe_w"] = nrm(ks[1], (kernel_size, kernel_size, dim), 0.1)
    p["lepe_b"] = nrm(ks[2], (dim,), 0.02)
    nbias_cols = num_heads if dim > 100 else 1   # matches WindowAttention.__init__
    p["rpb_table"] = nrm(ks[3], ((2 * window_size - 1) ** 2, nbias_cols), 0.02)
    p["proj_w"] = nrm(ks[4], (dim, dim), 0.02)
    p["proj_b"] = jnp.zeros((dim,), jnp.float32)
    p["fc1_w"] = nrm(ks[5], (dim, hidden), 0.02)
    p["fc1_b"] = jnp.zeros((hidden,), jnp.float32)
    p["ffn_dw_w"] = nrm(ks[6], (kernel_size, kernel_size, hidden), 0.1)
    p["ffn_dw_b"] = nrm(ks[7], (hidden,), 0.02)
    p["fc2_w"] = nrm(ks[8], (hidden, dim), 0.02)
    p["fc2_b"] = jnp.zeros((dim,), jnp.float32)
    return p


# ----------------------------------------------------------------------------
# PFTransformerLayer.forward
# ----------------------------------------------------------------------------
def pft_transformer_layer(x, pfa_list, x_size, params, *, num_heads, window_size,
                          shift_size, num_topk, layer_id, attn_mask=None):
    pfa_values, pfa_indices = list(pfa_list[0]), list(pfa_list[1])
    h, w = x_size
    b, n, c = x.shape
    nh = num_heads
    hd = c // nh
    scale = hd ** (-0.5)
    ws = window_size
    n_win = ws * ws
    shift = 1 if shift_size > 0 else 0
    bf = jnp.bfloat16

    if pfa_indices[shift] is not None or pfa_values[shift] is not None:
        # TODO(synk): sparse PFA path (SMM_QmK/SMM_AmV + pfa reweighting) not implemented.
        raise NotImplementedError("sparse PFA path not implemented")
    if num_topk[layer_id] < n_win:
        # TODO(synk): top-k attention pruning path not implemented.
        raise NotImplementedError("top-k pruning path not implemented")

    x2d = x.reshape(b * n, c)

    # norm1 + Wqkv (fused LN + matmul); output (3, b*n, c) bf16 = [q, k, v]
    qkv3 = ln_qkv_linear(x2d, params["wqkv_w"], params["wqkv_b"],
                         params["ln1_g"], params["ln1_b"], out_dtype=bf)
    qkv3_sp = qkv3.reshape(3, b, h, w, c)                              # free view

    # v_LePE: depthwise conv + GELU reading the v plane (leading index 2) directly
    v_lepe = dwconv_gelu(qkv3_sp, params["lepe_w"], params["lepe_b"],
                         sel=2, add_input=False, out_dtype=bf)         # (b,h,w,c)

    if shift_size > 0:
        # TODO(synk): fold the cyclic shift into the attention index_maps /
        #             pltpu.roll instead of full-tensor XLA rolls.
        qkv3_sh = jnp.roll(qkv3_sp, shift=(-shift_size, -shift_size), axis=(2, 3))
        vl_sh = jnp.roll(v_lepe, shift=(-shift_size, -shift_size), axis=(1, 2))
    else:
        qkv3_sh, vl_sh = qkv3_sp, v_lepe

    # relative position bias (+ shift mask); streamed to the kernel in bf16
    rpi = params["rpi_sa"].reshape(-1)
    rpb = params["rpb_table"][rpi].reshape(n_win, n_win, -1).transpose(2, 0, 1)
    rpb = jnp.broadcast_to(rpb, (nh, n_win, n_win)).astype(jnp.float32)
    if shift and attn_mask is not None:
        bias = rpb[None] + attn_mask[:, None].astype(jnp.float32)   # (nw, nh, N, N)
        per_window_bias = True
    else:
        bias = rpb[None]                                            # (1, nh, N, N)
        per_window_bias = False
    bias = bias.astype(bf)

    # window attention fused with window partition/reverse (via index_maps)
    o_sp, attn = window_attention(qkv3_sh, vl_sh, bias, nh=nh, ws=ws, scale=scale,
                                  per_window_bias=per_window_bias, out_dtype=bf)
    pfa_values[shift] = attn        # pfa_indices[shift] stays None (topk == n_win)

    if shift_size > 0:
        o_sp = jnp.roll(o_sp, shift=(shift_size, shift_size), axis=(1, 2))

    # attn proj with fused "+ shortcut" residual
    x1 = linear(o_sp.reshape(b * n, c), params["proj_w"], params["proj_b"],
                res=x2d, out_dtype=jnp.float32)

    # ConvFFN: (norm2 + fc1 + GELU) fused; dwconv fuses x + gelu(dwconv(x));
    # fc2 fuses the outer residual add.
    hdim = params["fc1_w"].shape[1]
    h1 = linear(x1, params["fc1_w"], params["fc1_b"],
                gamma=params["ln2_g"], beta=params["ln2_b"], act=True,
                out_dtype=bf)                                        # (b*n, hidden)
    h2 = dwconv_gelu(h1.reshape(b, h, w, hdim), params["ffn_dw_w"],
                     params["ffn_dw_b"], add_input=True, out_dtype=bf)
    out = linear(h2.reshape(b * n, hdim), params["fc2_w"], params["fc2_b"],
                 res=x1, out_dtype=jnp.float32)

    return out.reshape(b, n, c), [pfa_values, pfa_indices]


# ----------------------------------------------------------------------------
if __name__ == "__main__":
    key = jax.random.PRNGKey(0)
    b, hgt, wid = 2, 16, 16
    dim, num_heads = 32, 4
    window_size, shift_size = 8, 0
    convffn_kernel_size, mlp_ratio = 5, 2.0
    layer_id = 0
    num_topk = (window_size * window_size, window_size * window_size)  # dense regime
    n = hgt * wid

    k_x, k_p = jax.random.split(key)
    x = jax.random.normal(k_x, (b, n, dim), jnp.float32)
    params = init_params(k_p, dim, num_heads, window_size, convffn_kernel_size, mlp_ratio)
    params["rpi_sa"] = relative_position_index(window_size)

    pfa_list = [[None, None], [None, None]]  # [pfa_values, pfa_indices]
    y, pfa_out = pft_transformer_layer(
        x, pfa_list, (hgt, wid), params,
        num_heads=num_heads, window_size=window_size, shift_size=shift_size,
        num_topk=num_topk, layer_id=layer_id, attn_mask=None)

    jax.block_until_ready(y)
    jax.block_until_ready(pfa_out[0][0])
    assert y.shape == (b, n, dim)
    assert pfa_out[0][0].shape == (b * (hgt // window_size) * (wid // window_size),
                                   num_heads, window_size * window_size,
                                   window_size * window_size)
    print("KERNEL_OK")
</pallas_src>

<mosaic_0001>
module attributes {stable_mosaic.version = 11 : i64} {
  func.func @_ln_qkv_kernel(%arg0: i32, %arg1: memref<256x32xf32, #tpu.memory_space<vmem>>, %arg2: memref<1x32xf32, #tpu.memory_space<vmem>>, %arg3: memref<1x32xf32, #tpu.memory_space<vmem>>, %arg4: memref<32x32xbf16, #tpu.memory_space<vmem>>, %arg5: memref<32x32xbf16, #tpu.memory_space<vmem>>, %arg6: memref<32x32xbf16, #tpu.memory_space<vmem>>, %arg7: memref<3x32xf32, #tpu.memory_space<vmem>>, %arg8: memref<3x256x32xbf16, #tpu.memory_space<vmem>>) attributes {dimension_semantics = [#tpu.dimension_semantics<parallel>], iteration_bounds = array<i64: 2>, scalar_prefetch = 0 : i64, scratch_operands = 0 : i64, tpu.core_type = #tpu.core_type<tc>, window_params = [{transform_indices = @transform_0, window_bounds = array<i64: 256, 32>}, {pipeline_mode = #tpu.pipeline_mode<synchronous>, transform_indices = @transform_1, window_bounds = array<i64: 1, 32>}, {pipeline_mode = #tpu.pipeline_mode<synchronous>, transform_indices = @transform_2, window_bounds = array<i64: 1, 32>}, {pipeline_mode = #tpu.pipeline_mode<synchronous>, transform_indices = @transform_3, window_bounds = array<i64: 32, 32>}, {pipeline_mode = #tpu.pipeline_mode<synchronous>, transform_indices = @transform_4, window_bounds = array<i64: 32, 32>}, {pipeline_mode = #tpu.pipeline_mode<synchronous>, transform_indices = @transform_5, window_bounds = array<i64: 32, 32>}, {pipeline_mode = #tpu.pipeline_mode<synchronous>, transform_indices = @transform_6, window_bounds = array<i64: 3, 32>}, {transform_indices = @transform_7, window_bounds = array<i64: 3, 256, 32>}]} {
    %c0 = arith.constant 0 : index
    %c0_0 = arith.constant 0 : index
    %0 = vector.load %arg1[%c0, %c0_0] : memref<256x32xf32, #tpu.memory_space<vmem>>, vector<256x32xf32>
    %cst = arith.constant dense<0.000000e+00> : vector<256xf32>
    %1 = vector.multi_reduction <add>, %0, %cst [1] : vector<256x32xf32> to vector<256xf32>
    %2 = vector.shape_cast %1 : vector<256xf32> to vector<256x1xf32>
    %cst_1 = arith.constant 3.200000e+01 : f32
    %3 = vector.broadcast %cst_1 : f32 to vector<256x1xf32>
    %4 = arith.divf %2, %3 : vector<256x1xf32>
    %5 = vector.broadcast %4 : vector<256x1xf32> to vector<256x32xf32>
    %6 = arith.subf %0, %5 : vector<256x32xf32>
    %7 = arith.mulf %6, %6 : vector<256x32xf32>
    %cst_2 = arith.constant dense<0.000000e+00> : vector<256xf32>
    %8 = vector.multi_reduction <add>, %7, %cst_2 [1] : vector<256x32xf32> to vector<256xf32>
    %9 = vector.shape_cast %8 : vector<256xf32> to vector<256x1xf32>
    %cst_3 = arith.constant 3.200000e+01 : f32
    %10 = vector.broadcast %cst_3 : f32 to vector<256x1xf32>
    %11 = arith.divf %9, %10 : vector<256x1xf32>
    %12 = vector.broadcast %4 : vector<256x1xf32> to vector<256x32xf32>
    %13 = arith.subf %0, %12 : vector<256x32xf32>
    %cst_4 = arith.constant 9.99999974E-6 : f32
    %14 = vector.broadcast %cst_4 : f32 to vector<256x1xf32>
    %15 = arith.addf %11, %14 : vector<256x1xf32>
    %16 = math.rsqrt %15 : vector<256x1xf32>
    %17 = vector.broadcast %16 : vector<256x1xf32> to vector<256x32xf32>
    %18 = arith.mulf %13, %17 : vector<256x32xf32>
    %c0_5 = arith.constant 0 : index
    %c0_6 = arith.constant 0 : index
    %19 = vector.load %arg2[%c0_5, %c0_6] : memref<1x32xf32, #tpu.memory_space<vmem>>, vector<1x32xf32>
    %20 = vector.broadcast %19 : vector<1x32xf32> to vector<256x32xf32>
    %21 = arith.mulf %18, %20 : vector<256x32xf32>
    %c0_7 = arith.constant 0 : index
    %c0_8 = arith.constant 0 : index
    %22 = vector.load %arg3[%c0_7, %c0_8] : memref<1x32xf32, #tpu.memory_space<vmem>>, vector<1x32xf32>
    %23 = vector.broadcast %22 : vector<1x32xf32> to vector<256x32xf32>
    %24 = arith.addf %21, %23 : vector<256x32xf32>
    %25 = arith.truncf %24 : vector<256x32xf32> to vector<256x32xbf16>
    %c0_9 = arith.constant 0 : index
    %c0_10 = arith.constant 0 : index
    %26 = vector.load %arg7[%c0_9, %c0_10] : memref<3x32xf32, #tpu.memory_space<vmem>>, vector<3x32xf32>
    %c0_11 = arith.constant 0 : index
    %c0_12 = arith.constant 0 : index
    %27 = vector.load %arg4[%c0_11, %c0_12] : memref<32x32xbf16, #tpu.memory_space<vmem>>, vector<32x32xbf16>
    %cst_13 = arith.constant dense<0.000000e+00> : vector<256x32xf32>
    %28 = tpu.matmul %25, %27, %cst_13 {dimension_numbers = #tpu.dot_dimension_numbers<[1], [0], [0], [1], [0, 0, 1, 1], [], []>} : vector<256x32xbf16>, vector<32x32xbf16>, vector<256x32xf32> -> vector<256x32xf32>
    %29 = vector.extract_strided_slice %26 {offsets = [0, 0], sizes = [1, 32], strides = [1, 1]} : vector<3x32xf32> to vector<1x32xf32>
    %30 = vector.shape_cast %29 : vector<1x32xf32> to vector<32xf32>
    %31 = vector.shape_cast %30 : vector<32xf32> to vector<1x32xf32>
    %32 = vector.broadcast %31 : vector<1x32xf32> to vector<256x32xf32>
    %33 = arith.addf %28, %32 : vector<256x32xf32>
    %34 = arith.truncf %33 : vector<256x32xf32> to vector<256x32xbf16>
    %c0_14 = arith.constant 0 : index
    %c0_15 = arith.constant 0 : index
    %c0_16 = arith.constant 0 : index
    %35 = vector.load %arg8[%c0_14, %c0_15, %c0_16] : memref<3x256x32xbf16, #tpu.memory_space<vmem>>, vector<1x256x32xbf16>
    %36 = vector.shape_cast %35 : vector<1x256x32xbf16> to vector<256x32xbf16>
    %37 = vector.shape_cast %34 : vector<256x32xbf16> to vector<1x256x32xbf16>
    tpu.vector_store %arg8[%c0_14, %c0_15, %c0_16], %37 {strides = array<i32>} : memref<3x256x32xbf16, #tpu.memory_space<vmem>>, vector<1x256x32xbf16>,
    %c0_17 = arith.constant 0 : index
    %c0_18 = arith.constant 0 : index
    %38 = vector.load %arg5[%c0_17, %c0_18] : memref<32x32xbf16, #tpu.memory_space<vmem>>, vector<32x32xbf16>
    %cst_19 = arith.constant dense<0.000000e+00> : vector<256x32xf32>
    %39 = tpu.matmul %25, %38, %cst_19 {dimension_numbers = #tpu.dot_dimension_numbers<[1], [0], [0], [1], [0, 0, 1, 1], [], []>} : vector<256x32xbf16>, vector<32x32xbf16>, vector<256x32xf32> -> vector<256x32xf32>
    %40 = vector.extract_strided_slice %26 {offsets = [1, 0], sizes = [1, 32], strides = [1, 1]} : vector<3x32xf32> to vector<1x32xf32>
    %41 = vector.shape_cast %40 : vector<1x32xf32> to vector<32xf32>
    %42 = vector.shape_cast %41 : vector<32xf32> to vector<1x32xf32>
    %43 = vector.broadcast %42 : vector<1x32xf32> to vector<256x32xf32>
    %44 = arith.addf %39, %43 : vector<256x32xf32>
    %45 = arith.truncf %44 : vector<256x32xf32> to vector<256x32xbf16>
    %c1 = arith.constant 1 : index
    %c0_20 = arith.constant 0 : index
    %c0_21 = arith.constant 0 : index
    %46 = vector.load %arg8[%c1, %c0_20, %c0_21] : memref<3x256x32xbf16, #tpu.memory_space<vmem>>, vector<1x256x32xbf16>
    %47 = vector.shape_cast %46 : vector<1x256x32xbf16> to vector<256x32xbf16>
    %48 = vector.shape_cast %45 : vector<256x32xbf16> to vector<1x256x32xbf16>
    tpu.vector_store %arg8[%c1, %c0_20, %c0_21], %48 {strides = array<i32>} : memref<3x256x32xbf16, #tpu.memory_space<vmem>>, vector<1x256x32xbf16>,
    %c0_22 = arith.constant 0 : index
    %c0_23 = arith.constant 0 : index
    %49 = vector.load %arg6[%c0_22, %c0_23] : memref<32x32xbf16, #tpu.memory_space<vmem>>, vector<32x32xbf16>
    %cst_24 = arith.constant dense<0.000000e+00> : vector<256x32xf32>
    %50 = tpu.matmul %25, %49, %cst_24 {dimension_numbers = #tpu.dot_dimension_numbers<[1], [0], [0], [1], [0, 0, 1, 1], [], []>} : vector<256x32xbf16>, vector<32x32xbf16>, vector<256x32xf32> -> vector<256x32xf32>
    %51 = vector.extract_strided_slice %26 {offsets = [2, 0], sizes = [1, 32], strides = [1, 1]} : vector<3x32xf32> to vector<1x32xf32>
    %52 = vector.shape_cast %51 : vector<1x32xf32> to vector<32xf32>
    %53 = vector.shape_cast %52 : vector<32xf32> to vector<1x32xf32>
    %54 = vector.broadcast %53 : vector<1x32xf32> to vector<256x32xf32>
    %55 = arith.addf %50, %54 : vector<256x32xf32>
    %56 = arith.truncf %55 : vector<256x32xf32> to vector<256x32xbf16>
    %c2 = arith.constant 2 : index
    %c0_25 = arith.constant 0 : index
    %c0_26 = arith.constant 0 : index
    %57 = vector.load %arg8[%c2, %c0_25, %c0_26] : memref<3x256x32xbf16, #tpu.memory_space<vmem>>, vector<1x256x32xbf16>
    %58 = vector.shape_cast %57 : vector<1x256x32xbf16> to vector<256x32xbf16>
    %59 = vector.shape_cast %56 : vector<256x32xbf16> to vector<1x256x32xbf16>
    tpu.vector_store %arg8[%c2, %c0_25, %c0_26], %59 {strides = array<i32>} : memref<3x256x32xbf16, #tpu.memory_space<vmem>>, vector<1x256x32xbf16>,
    return
  }
  func.func @transform_0(%arg0: i32) -> (i32, i32) {
    %c0_i32 = arith.constant 0 : i32
    %c0_i32_0 = arith.constant 0 : i32
    return %arg0, %c0_i32 : i32, i32
  }
  func.func @transform_1(%arg0: i32) -> (i32, i32) {
    %c0_i32 = arith.constant 0 : i32
    %c0_i32_0 = arith.constant 0 : i32
    %c0_i32_1 = arith.constant 0 : i32
    return %c0_i32, %c0_i32_0 : i32, i32
  }
  func.func @transform_2(%arg0: i32) -> (i32, i32) {
    %c0_i32 = arith.constant 0 : i32
    %c0_i32_0 = arith.constant 0 : i32
    %c0_i32_1 = arith.constant 0 : i32
    return %c0_i32, %c0_i32_0 : i32, i32
  }
  func.func @transform_3(%arg0: i32) -> (i32, i32) {
    %c0_i32 = arith.constant 0 : i32
    %c0_i32_0 = arith.constant 0 : i32
    %c0_i32_1 = arith.constant 0 : i32
    return %c0_i32, %c0_i32_0 : i32, i32
  }
  func.func @transform_4(%arg0: i32) -> (i32, i32) {
    %c0_i32 = arith.constant 0 : i32
    %c0_i32_0 = arith.constant 0 : i32
    %c0_i32_1 = arith.constant 0 : i32
    return %c0_i32, %c0_i32_0 : i32, i32
  }
  func.func @transform_5(%arg0: i32) -> (i32, i32) {
    %c0_i32 = arith.constant 0 : i32
    %c0_i32_0 = arith.constant 0 : i32
    %c0_i32_1 = arith.constant 0 : i32
    return %c0_i32, %c0_i32_0 : i32, i32
  }
  func.func @transform_6(%arg0: i32) -> (i32, i32) {
    %c0_i32 = arith.constant 0 : i32
    %c0_i32_0 = arith.constant 0 : i32
    %c0_i32_1 = arith.constant 0 : i32
    return %c0_i32, %c0_i32_0 : i32, i32
  }
  func.func @transform_7(%arg0: i32) -> (i32, i32, i32) {
    %c0_i32 = arith.constant 0 : i32
    %c0_i32_0 = arith.constant 0 : i32
    %c0_i32_1 = arith.constant 0 : i32
    return %c0_i32, %arg0, %c0_i32_0 : i32, i32, i32
  }
}

</mosaic_0001>

<llo_original>
// kernel: tpu_custom_call.1
$region0: #{tpu_custom_call.1}
  #allocation0 [shape = 'u32[]', space=smem, size = 0x4, offset = 0x4, fixed_abs, tag = 'smem constant byte address 0x4 - core index']
  #allocation1 [shape = 'u32[144,128]{1,0:T(1,128)}', space=vmem, size = 0x12000, scoped, tag = 'internal scratch']
  %s0 = inlined_call_operand.vmem [shape: f32[512,32], index: 0, kind: input, shape index: {}]
  %s1 = inlined_call_operand.vmem [shape: f32[1,32], index: 1, kind: input, shape index: {}]
  %s2 = inlined_call_operand.vmem [shape: f32[1,32], index: 2, kind: input, shape index: {}]
  %s3 = inlined_call_operand.vmem [shape: bf16[32,32], index: 3, kind: input, shape index: {}]
  %s4 = inlined_call_operand.vmem [shape: bf16[32,32], index: 4, kind: input, shape index: {}]
  %s5 = inlined_call_operand.vmem [shape: bf16[32,32], index: 5, kind: input, shape index: {}]
  %s6 = inlined_call_operand.vmem [shape: f32[3,32], index: 6, kind: input, shape index: {}]
  %s7 = inlined_call_operand.vmem [shape: bf16[3,512,32], index: 7, kind: output, shape index: {}]
  %s8 = sld [smem:[#allocation0]]
  $region98: #{tpu_custom_call.1} parent=0
    _
  %s10 = ssub.s32 1, %s8
  %s11 = scalar_select 0, %s10, %s8
  $region1: #{tpu_custom_call.1} parent=0
    #allocation2 [shape = 'u8[393216]{0}', space=vmem, size = 0x60000, scoped, tag = 'output window, operand 0']
    loop: start=0, step=1, limit=4
    $region2: #{tpu_custom_call.1} parent=1 // loop_pre_header
      _
    $region3: #{tpu_custom_call.1} parent=1 // loop_header
      %s13 = sphi 0, %s17
      %p14 = scmp.ge.s32.totalorder %s13, 4
      %s23 = sphi 0, %s25
      %s26 = sphi 0, %s23
      %s27 = sphi 0, %s26
      %s43 = sphi 0, %s27
      %s47 = sphi 0, %s47
      %s49 = sphi 0, %s47
      %s50 = sphi 0, %s49
      %s64 = sphi 0, %s50
      %s68 = sphi 0, %s68
      %s70 = sphi 0, %s68
      %s71 = sphi 0, %s70
      %s85 = sphi 0, %s71
      %s89 = sphi 0, %s89
      %s91 = sphi 0, %s89
      %s92 = sphi 0, %s91
      %s106 = sphi 0, %s92
      %s110 = sphi 0, %s110
      %s112 = sphi 0, %s110
      %s113 = sphi 0, %s112
      %s127 = sphi 0, %s113
      %s131 = sphi 0, %s131
      %s133 = sphi 0, %s131
      %s134 = sphi 0, %s133
      %s148 = sphi 0, %s134
      %s152 = sphi 0, %s152
      %s154 = sphi 0, %s152
      %s155 = sphi 0, %s154
      %s169 = sphi 0, %s155
      %s175 = sphi 0, %s177
      %s178 = sphi 0, %s175
      %s179 = sphi 0, %s178
      %s195 = sphi 0, %s179
    $region4: #{tpu_custom_call.1} parent=1 // loop_header_branch
      %16 = sbr.rel (%p14) target = $region8
    $region5: #{tpu_custom_call.1} parent=1 // loop_body
      %s18 = ssub.s32 %s13, 1
      %s19 = ssub.s32 %s13, 2
      %s20 = sadd.s32 %s13, 1
      %s21 = ssub.s32 %s13, %s20
      %p22 = scmp.eq.s32.totalorder %s21, 0
      %s24 = sadd.s32 %s23, 1
      %s25 = scalar_select %p22, %s23, %s24
      %p28 = pneg %p22
      %p29 = scmp.eq.s32.totalorder %s13, 1
      %p30 = por %p28, %p29
      %p31 = scmp.ne.s32.totalorder %s23, %s26
      %p32 = scmp.eq.s32.totalorder %s13, 0
      %p33 = por %p31, %p32
      %p34 = scmp.ne.s32.totalorder %s23, %s26
      %p35 = scmp.eq.s32.totalorder %s18, 1
      %p36 = por %p34, %p35
      %p37 = scmp.ne.s32.totalorder %s26, %s27
      %p38 = scmp.eq.s32.totalorder %s18, 0
      %p39 = por %p37, %p38
      %p40 = scmp.ne.s32.totalorder %s26, %s27
      %p41 = scmp.eq.s32.totalorder %s19, 1
      %p42 = por %p40, %p41
      %p44 = scmp.ne.s32.totalorder %s27, %s43
      %p45 = scmp.eq.s32.totalorder %s19, 0
      %p46 = por %p44, %p45
      %s48 = sadd.s32 %s47, 1
      %p51 = scmp.eq.s32.totalorder %s13, 1
      %p52 = scmp.ne.s32.totalorder %s47, %s49
      %p53 = scmp.eq.s32.totalorder %s13, 0
      %p54 = por %p52, %p53
      %p55 = scmp.ne.s32.totalorder %s47, %s49
      %p56 = scmp.eq.s32.totalorder %s18, 1
      %p57 = por %p55, %p56
      %p58 = scmp.ne.s32.totalorder %s49, %s50
      %p59 = scmp.eq.s32.totalorder %s18, 0
      %p60 = por %p58, %p59
      %p61 = scmp.ne.s32.totalorder %s49, %s50
      %p62 = scmp.eq.s32.totalorder %s19, 1
      %p63 = por %p61, %p62
      %p65 = scmp.ne.s32.totalorder %s50, %s64
      %p66 = scmp.eq.s32.totalorder %s19, 0
      %p67 = por %p65, %p66
      %s69 = sadd.s32 %s68, 1
      %p72 = scmp.eq.s32.totalorder %s13, 1
      %p73 = scmp.ne.s32.totalorder %s68, %s70
      %p74 = scmp.eq.s32.totalorder %s13, 0
      %p75 = por %p73, %p74
      %p76 = scmp.ne.s32.totalorder %s68, %s70
      %p77 = scmp.eq.s32.totalorder %s18, 1
      %p78 = por %p76, %p77
      %p79 = scmp.ne.s32.totalorder %s70, %s71
      %p80 = scmp.eq.s32.totalorder %s18, 0
      %p81 = por %p79, %p80
      %p82 = scmp.ne.s32.totalorder %s70, %s71
      %p83 = scmp.eq.s32.totalorder %s19, 1
      %p84 = por %p82, %p83
      %p86 = scmp.ne.s32.totalorder %s71, %s85
      %p87 = scmp.eq.s32.totalorder %s19, 0
      %p88 = por %p86, %p87
      %s90 = sadd.s32 %s89, 1
      %p93 = scmp.eq.s32.totalorder %s13, 1
      %p94 = scmp.ne.s32.totalorder %s89, %s91
      %p95 = scmp.eq.s32.totalorder %s13, 0
      %p96 = por %p94, %p95
      %p97 = scmp.ne.s32.totalorder %s89, %s91
      %p98 = scmp.eq.s32.totalorder %s18, 1
      %p99 = por %p97, %p98
      %p100 = scmp.ne.s32.totalorder %s91, %s92
      %p101 = scmp.eq.s32.totalorder %s18, 0
      %p102 = por %p100, %p101
      %p103 = scmp.ne.s32.totalorder %s91, %s92
      %p104 = scmp.eq.s32.totalorder %s19, 1
      %p105 = por %p103, %p104
      %p107 = scmp.ne.s32.totalorder %s92, %s106
      %p108 = scmp.eq.s32.totalorder %s19, 0
      %p109 = por %p107, %p108
      %s111 = sadd.s32 %s110, 1
      %p114 = scmp.eq.s32.totalorder %s13, 1
      %p115 = scmp.ne.s32.totalorder %s110, %s112
      %p116 = scmp.eq.s32.totalorder %s13, 0
      %p117 = por %p115, %p116
      %p118 = scmp.ne.s32.totalorder %s110, %s112
      %p119 = scmp.eq.s32.totalorder %s18, 1
      %p120 = por %p118, %p119
      %p121 = scmp.ne.s32.totalorder %s112, %s113
      %p122 = scmp.eq.s32.totalorder %s18, 0
      %p123 = por %p121, %p122
      %p124 = scmp.ne.s32.totalorder %s112, %s113
      %p125 = scmp.eq.s32.totalorder %s19, 1
      %p126 = por %p124, %p125
      %p128 = scmp.ne.s32.totalorder %s113, %s127
      %p129 = scmp.eq.s32.totalorder %s19, 0
      %p130 = por %p128, %p129
      %s132 = sadd.s32 %s131, 1
      %p135 = scmp.eq.s32.totalorder %s13, 1
      %p136 = scmp.ne.s32.totalorder %s131, %s133
      %p137 = scmp.eq.s32.totalorder %s13, 0
      %p138 = por %p136, %p137
      %p139 = scmp.ne.s32.totalorder %s131, %s133
      %p140 = scmp.eq.s32.totalorder %s18, 1
      %p141 = por %p139, %p140
      %p142 = scmp.ne.s32.totalorder %s133, %s134
      %p143 = scmp.eq.s32.totalorder %s18, 0
      %p144 = por %p142, %p143
      %p145 = scmp.ne.s32.totalorder %s133, %s134
      %p146 = scmp.eq.s32.totalorder %s19, 1
      %p147 = por %p145, %p146
      %p149 = scmp.ne.s32.totalorder %s134, %s148
      %p150 = scmp.eq.s32.totalorder %s19, 0
      %p151 = por %p149, %p150
      %s153 = sadd.s32 %s152, 1
      %p156 = scmp.eq.s32.totalorder %s13, 1
      %p157 = scmp.ne.s32.totalorder %s152, %s154
      %p158 = scmp.eq.s32.totalorder %s13, 0
      %p159 = por %p157, %p158
      %p160 = scmp.ne.s32.totalorder %s152, %s154
      %p161 = scmp.eq.s32.totalorder %s18, 1
      %p162 = por %p160, %p161
      %p163 = scmp.ne.s32.totalorder %s154, %s155
      %p164 = scmp.eq.s32.totalorder %s18, 0
      %p165 = por %p163, %p164
      %p166 = scmp.ne.s32.totalorder %s154, %s155
      %p167 = scmp.eq.s32.totalorder %s19, 1
      %p168 = por %p166, %p167
      %p170 = scmp.ne.s32.totalorder %s155, %s169
      %p171 = scmp.eq.s32.totalorder %s19, 0
      %p172 = por %p170, %p171
      %s173 = ssub.s32 %s13, %s20
      %p174 = scmp.eq.s32.totalorder %s173, 0
      %s176 = sadd.s32 %s175, 1
      %s177 = scalar_select %p174, %s175, %s176
      %p180 = pneg %p174
      %p181 = scmp.eq.s32.totalorder %s13, 1
      %p182 = por %p180, %p181
      %p183 = scmp.ne.s32.totalorder %s175, %s178
      %p184 = scmp.eq.s32.totalorder %s13, 0
      %p185 = por %p183, %p184
      %p186 = scmp.ne.s32.totalorder %s175, %s178
      %p187 = scmp.eq.s32.totalorder %s18, 1
      %p188 = por %p186, %p187
      %p189 = scmp.ne.s32.totalorder %s178, %s179
      %p190 = scmp.eq.s32.totalorder %s18, 0
      %p191 = por %p189, %p190
      %p192 = scmp.ne.s32.totalorder %s178, %s179
      %p193 = scmp.eq.s32.totalorder %s19, 1
      %p194 = por %p192, %p193
      %p196 = scmp.ne.s32.totalorder %s179, %s195
      %p197 = scmp.eq.s32.totalorder %s19, 0
      %p198 = por %p196, %p197
      %p199 = scmp.le.s32.totalorder 1, %s13
      %p200 = scmp.lt.s32.totalorder %s13, 3
      %p201 = pnand %p199, %p200
      %p202 = pneg %p201
      // Predicated region
      $region9: #{tpu_custom_call.1} parent=5 // pred_check
        _
      $region10: #{tpu_custom_call.1} parent=5 // pred_check_branch
        %204 = sbr.rel (%p201) target = $region12
      $region11: #{tpu_custom_call.1} parent=5 // pred_region
        %s205 = ssub.s32 %s13, 1
        // Predicated region
        $region13: #{tpu_custom_call.1} parent=11 // pred_check
          %p206 = pneg %p60
        $region14: #{tpu_custom_call.1} parent=11 // pred_check_branch
          %208 = sbr.rel (%p206) target = $region16
        $region15: #{tpu_custom_call.1} parent=11 // pred_region
          _
        $region16: #{tpu_custom_call.1} parent=11 // pred_fallthru
          _
        // Predicated region
        $region17: #{tpu_custom_call.1} parent=11 // pred_check
          %p209 = pneg %p81
        $region18: #{tpu_custom_call.1} parent=11 // pred_check_branch
          %211 = sbr.rel (%p209) target = $region20
        $region19: #{tpu_custom_call.1} parent=11 // pred_region
          _
        $region20: #{tpu_custom_call.1} parent=11 // pred_fallthru
          _
        // Predicated region
        $region21: #{tpu_custom_call.1} parent=11 // pred_check
          %p212 = pneg %p102
        $region22: #{tpu_custom_call.1} parent=11 // pred_check_branch
          %214 = sbr.rel (%p212) target = $region24
        $region23: #{tpu_custom_call.1} parent=11 // pred_region
          _
        $region24: #{tpu_custom_call.1} parent=11 // pred_fallthru
          _
        // Predicated region
        $region25: #{tpu_custom_call.1} parent=11 // pred_check
          %p215 = pneg %p123
        $region26: #{tpu_custom_call.1} parent=11 // pred_check_branch
          %217 = sbr.rel (%p215) target = $region28
        $region27: #{tpu_custom_call.1} parent=11 // pred_region
          _
        $region28: #{tpu_custom_call.1} parent=11 // pred_fallthru
          _
        // Predicated region
        $region29: #{tpu_custom_call.1} parent=11 // pred_check
          %p218 = pneg %p144
        $region30: #{tpu_custom_call.1} parent=11 // pred_check_branch
          %220 = sbr.rel (%p218) target = $region32
        $region31: #{tpu_custom_call.1} parent=11 // pred_region
          _
        $region32: #{tpu_custom_call.1} parent=11 // pred_fallthru
          _
        // Predicated region
        $region33: #{tpu_custom_call.1} parent=11 // pred_check
          %p221 = pneg %p165
        $region34: #{tpu_custom_call.1} parent=11 // pred_check_branch
          %223 = sbr.rel (%p221) target = $region36
        $region35: #{tpu_custom_call.1} parent=11 // pred_region
          _
        $region36: #{tpu_custom_call.1} parent=11 // pred_fallthru
          _
      $region12: #{tpu_custom_call.1} parent=5 // pred_fallthru
        _
      %p224 = scmp.lt.s32.totalorder %s13, 2
      // Predicated region
      $region37: #{tpu_custom_call.1} parent=5 // pred_check
        %p225 = pneg %p224
      $region38: #{tpu_custom_call.1} parent=5 // pred_check_branch
        %227 = sbr.rel (%p225) target = $region40
      $region39: #{tpu_custom_call.1} parent=5 // pred_region
        // Predicated region
        $region41: #{tpu_custom_call.1} parent=39 // pred_check
          %p228 = pneg %p33
        $region42: #{tpu_custom_call.1} parent=39 // pred_check_branch
          %230 = sbr.rel (%p228) target = $region44
        $region43: #{tpu_custom_call.1} parent=39 // pred_region
          %s231 = smul.u32 32, %s13
          %p232 = scmp.lt.s32.totalorder %s231, 63
          %s233 = scalar_select %p232, %s231, 63
          %s234 = smul.addr %s233, 8
          %s235 = scalar_lea.vmem %s0, %s234
          %s236 = smul.u32 32, %s13
        $region44: #{tpu_custom_call.1} parent=39 // pred_fallthru
          _
      $region40: #{tpu_custom_call.1} parent=5 // pred_fallthru
        _
      %p237 = scmp.le.s32.totalorder 1, %s13
      %p238 = scmp.lt.s32.totalorder %s13, 3
      %p239 = pnand %p237, %p238
      %p240 = pneg %p239
      // Predicated region
      $region45: #{tpu_custom_call.1} parent=5 // pred_check
        _
      $region46: #{tpu_custom_call.1} parent=5 // pred_check_branch
        %242 = sbr.rel (%p239) target = $region48
      $region47: #{tpu_custom_call.1} parent=5 // pred_region
        %s243 = ssub.s32 %s13, 1
        %s244 = smul.u32 32, %s18
        %p245 = scmp.lt.s32.totalorder %s244, 63
        %s246 = scalar_select %p245, %s244, 63
        %s247 = smul.addr %s246, 8
        %s248 = scalar_lea.vmem %s0, %s247
        %p249 = pneg %p39
        %p250 = pneg %p36
        %p251 = pneg %p60
        %p252 = pneg %p57
        %p253 = pneg %p81
        %p254 = pneg %p78
        %p255 = pneg %p102
        %p256 = pneg %p99
        %p257 = pneg %p123
        %p258 = pneg %p120
        %p259 = pneg %p144
        %p260 = pneg %p141
        %p261 = pneg %p165
        %p262 = pneg %p162
        %p263 = pneg %p191
        %p264 = pneg %p188
        %s265 = sand.u32 %s178, 1
        %s266 = sand.u32 %s178, 1
        %s267 = smul.addr %s266, 384
        %s268 = scalar_lea.vmem [#allocation2], %s267
        %s269 = smul.u32 32, %s18
        %p270 = scmp.lt.s32.totalorder %s269, 63
        %s271 = scalar_select %p270, %s269, 63
        %s272 = smul.addr %s271, 8
        %s273 = scalar_lea.vmem %s0, %s272
        %s274 = smul.u32 32, %s18
        %s275 = smul.u32 32, %s18
        %v277 = vld [vmem:[%s273] sm:$0xff]
        %v278 = vld [vmem:[%s273 + $0x8] sm:$0xff]
        %v279 = vld [vmem:[%s273 + $0x10] sm:$0xff]
        %v280 = vld [vmem:[%s273 + $0x18] sm:$0xff]
        %v281 = vld [vmem:[%s273 + $0x20] sm:$0xff]
        %v282 = vld [vmem:[%s273 + $0x28] sm:$0xff]
        %v283 = vld [vmem:[%s273 + $0x30] sm:$0xff]
        %v284 = vld [vmem:[%s273 + $0x38] sm:$0xff]
        %v285 = vld [vmem:[%s273 + $0x40] sm:$0xff]
        %v286 = vld [vmem:[%s273 + $0x48] sm:$0xff]
        %v287 = vld [vmem:[%s273 + $0x50] sm:$0xff]
        %v288 = vld [vmem:[%s273 + $0x58] sm:$0xff]
        %v289 = vld [vmem:[%s273 + $0x60] sm:$0xff]
        %v290 = vld [vmem:[%s273 + $0x68] sm:$0xff]
        %v291 = vld [vmem:[%s273 + $0x70] sm:$0xff]
        %v292 = vld [vmem:[%s273 + $0x78] sm:$0xff]
        %v293 = vld [vmem:[%s273 + $0x80] sm:$0xff]
        %v294 = vld [vmem:[%s273 + $0x88] sm:$0xff]
        %v295 = vld [vmem:[%s273 + $0x90] sm:$0xff]
        %v296 = vld [vmem:[%s273 + $0x98] sm:$0xff]
        %v297 = vld [vmem:[%s273 + $0xa0] sm:$0xff]
        %v298 = vld [vmem:[%s273 + $0xa8] sm:$0xff]
        %v299 = vld [vmem:[%s273 + $0xb0] sm:$0xff]
        %v300 = vld [vmem:[%s273 + $0xb8] sm:$0xff]
        %v301 = vld [vmem:[%s273 + $0xc0] sm:$0xff]
        %v302 = vld [vmem:[%s273 + $0xc8] sm:$0xff]
        %v303 = vld [vmem:[%s273 + $0xd0] sm:$0xff]
        %v304 = vld [vmem:[%s273 + $0xd8] sm:$0xff]
        %v305 = vld [vmem:[%s273 + $0xe0] sm:$0xff]
        %v306 = vld [vmem:[%s273 + $0xe8] sm:$0xff]
        %v307 = vld [vmem:[%s273 + $0xf0] sm:$0xff]
        %v308 = vld [vmem:[%s273 + $0xf8] sm:$0xff]
        %vm309 = vcmask 261120
        %v310 = vsel %vm309, %v277, 0.0
        %311 = vadd.xlane.f32.xlu0 %v310
        %v312 = vpop.xlane.xlu0 %311
        %v313 = vsel %vm309, %v278, 0.0
        %314 = vadd.xlane.f32.xlu0 %v313
        %v315 = vpop.xlane.xlu0 %314
        %v316 = vsel %vm309, %v279, 0.0
        %317 = vadd.xlane.f32.xlu0 %v316
        %v318 = vpop.xlane.xlu0 %317
        %v319 = vsel %vm309, %v280, 0.0
        %320 = vadd.xlane.f32.xlu0 %v319
        %v321 = vpop.xlane.xlu0 %320
        %v322 = vsel %vm309, %v281, 0.0
        %323 = vadd.xlane.f32.xlu0 %v322
        %v324 = vpop.xlane.xlu0 %323
        %v325 = vsel %vm309, %v282, 0.0
        %326 = vadd.xlane.f32.xlu0 %v325
        %v327 = vpop.xlane.xlu0 %326
        %v328 = vsel %vm309, %v283, 0.0
        %329 = vadd.xlane.f32.xlu0 %v328
        %v330 = vpop.xlane.xlu0 %329
        %v331 = vsel %vm309, %v284, 0.0
        %332 = vadd.xlane.f32.xlu0 %v331
        %v333 = vpop.xlane.xlu0 %332
        %v334 = vsel %vm309, %v285, 0.0
        %335 = vadd.xlane.f32.xlu0 %v334
        %v336 = vpop.xlane.xlu0 %335
        %v337 = vsel %vm309, %v286, 0.0
        %338 = vadd.xlane.f32.xlu0 %v337
        %v339 = vpop.xlane.xlu0 %338
        %v340 = vsel %vm309, %v287, 0.0
        %341 = vadd.xlane.f32.xlu0 %v340
        %v342 = vpop.xlane.xlu0 %341
        %v343 = vsel %vm309, %v288, 0.0
        %344 = vadd.xlane.f32.xlu0 %v343
        %v345 = vpop.xlane.xlu0 %344
        %v346 = vsel %vm309, %v289, 0.0
        %347 = vadd.xlane.f32.xlu0 %v346
        %v348 = vpop.xlane.xlu0 %347
        %v349 = vsel %vm309, %v290, 0.0
        %350 = vadd.xlane.f32.xlu0 %v349
        %v351 = vpop.xlane.xlu0 %350
        %v352 = vsel %vm309, %v291, 0.0
        %353 = vadd.xlane.f32.xlu0 %v352
        %v354 = vpop.xlane.xlu0 %353
        %v355 = vsel %vm309, %v292, 0.0
        %356 = vadd.xlane.f32.xlu0 %v355
        %v357 = vpop.xlane.xlu0 %356
        %v358 = vsel %vm309, %v293, 0.0
        %359 = vadd.xlane.f32.xlu0 %v358
        %v360 = vpop.xlane.xlu0 %359
        %v361 = vsel %vm309, %v294, 0.0
        %362 = vadd.xlane.f32.xlu0 %v361
        %v363 = vpop.xlane.xlu0 %362
        %v364 = vsel %vm309, %v295, 0.0
        %365 = vadd.xlane.f32.xlu0 %v364
        %v366 = vpop.xlane.xlu0 %365
        %v367 = vsel %vm309, %v296, 0.0
        %368 = vadd.xlane.f32.xlu0 %v367
        %v369 = vpop.xlane.xlu0 %368
        %v370 = vsel %vm309, %v297, 0.0
        %371 = vadd.xlane.f32.xlu0 %v370
        %v372 = vpop.xlane.xlu0 %371
        %v373 = vsel %vm309, %v298, 0.0
        %374 = vadd.xlane.f32.xlu0 %v373
        %v375 = vpop.xlane.xlu0 %374
        %v376 = vsel %vm309, %v299, 0.0
        %377 = vadd.xlane.f32.xlu0 %v376
        %v378 = vpop.xlane.xlu0 %377
        %v379 = vsel %vm309, %v300, 0.0
        %380 = vadd.xlane.f32.xlu0 %v379
        %v381 = vpop.xlane.xlu0 %380
        %v382 = vsel %vm309, %v301, 0.0
        %383 = vadd.xlane.f32.xlu0 %v382
        %v384 = vpop.xlane.xlu0 %383
        %v385 = vsel %vm309, %v302, 0.0
        %386 = vadd.xlane.f32.xlu0 %v385
        %v387 = vpop.xlane.xlu0 %386
        %v388 = vsel %vm309, %v303, 0.0
        %389 = vadd.xlane.f32.xlu0 %v388
        %v390 = vpop.xlane.xlu0 %389
        %v391 = vsel %vm309, %v304, 0.0
        %392 = vadd.xlane.f32.xlu0 %v391
        %v393 = vpop.xlane.xlu0 %392
        %v394 = vsel %vm309, %v305, 0.0
        %395 = vadd.xlane.f32.xlu0 %v394
        %v396 = vpop.xlane.xlu0 %395
        %v397 = vsel %vm309, %v306, 0.0
        %398 = vadd.xlane.f32.xlu0 %v397
        %v399 = vpop.xlane.xlu0 %398
        %v400 = vsel %vm309, %v307, 0.0
        %401 = vadd.xlane.f32.xlu0 %v400
        %v402 = vpop.xlane.xlu0 %401
        %v403 = vsel %vm309, %v308, 0.0
        %404 = vadd.xlane.f32.xlu0 %v403
        %v405 = vpop.xlane.xlu0 %404
        %v406 = vrcp.pop 32.0
        %v407 = vmul.f32 %v312, %v406
        %v408 = vmul.f32 %v315, %v406
        %v409 = vmul.f32 %v318, %v406
        %v410 = vmul.f32 %v321, %v406
        %v411 = vmul.f32 %v324, %v406
        %v412 = vmul.f32 %v327, %v406
        %v413 = vmul.f32 %v330, %v406
        %v414 = vmul.f32 %v333, %v406
        %v415 = vmul.f32 %v336, %v406
        %v416 = vmul.f32 %v339, %v406
        %v417 = vmul.f32 %v342, %v406
        %v418 = vmul.f32 %v345, %v406
        %v419 = vmul.f32 %v348, %v406
        %v420 = vmul.f32 %v351, %v406
        %v421 = vmul.f32 %v354, %v406
        %v422 = vmul.f32 %v357, %v406
        %v423 = vmul.f32 %v360, %v406
        %v424 = vmul.f32 %v363, %v406
        %v425 = vmul.f32 %v366, %v406
        %v426 = vmul.f32 %v369, %v406
        %v427 = vmul.f32 %v372, %v406
        %v428 = vmul.f32 %v375, %v406
        %v429 = vmul.f32 %v378, %v406
        %v430 = vmul.f32 %v381, %v406
        %v431 = vmul.f32 %v384, %v406
        %v432 = vmul.f32 %v387, %v406
        %v433 = vmul.f32 %v390, %v406
        %v434 = vmul.f32 %v393, %v406
        %v435 = vmul.f32 %v396, %v406
        %v436 = vmul.f32 %v399, %v406
        %v437 = vmul.f32 %v402, %v406
        %v438 = vmul.f32 %v405, %v406
        %v439 = vsub.f32 %v277, %v407
        %v440 = vsub.f32 %v278, %v408
        %v441 = vsub.f32 %v279, %v409
        %v442 = vsub.f32 %v280, %v410
        %v443 = vsub.f32 %v281, %v411
        %v444 = vsub.f32 %v282, %v412
        %v445 = vsub.f32 %v283, %v413
        %v446 = vsub.f32 %v284, %v414
        %v447 = vsub.f32 %v285, %v415
        %v448 = vsub.f32 %v286, %v416
        %v449 = vsub.f32 %v287, %v417
        %v450 = vsub.f32 %v288, %v418
        %v451 = vsub.f32 %v289, %v419
        %v452 = vsub.f32 %v290, %v420
        %v453 = vsub.f32 %v291, %v421
        %v454 = vsub.f32 %v292, %v422
        %v455 = vsub.f32 %v293, %v423
        %v456 = vsub.f32 %v294, %v424
        %v457 = vsub.f32 %v295, %v425
        %v458 = vsub.f32 %v296, %v426
        %v459 = vsub.f32 %v297, %v427
        %v460 = vsub.f32 %v298, %v428
        %v461 = vsub.f32 %v299, %v429
        %v462 = vsub.f32 %v300, %v430
        %v463 = vsub.f32 %v301, %v431
        %v464 = vsub.f32 %v302, %v432
        %v465 = vsub.f32 %v303, %v433
        %v466 = vsub.f32 %v304, %v434
        %v467 = vsub.f32 %v305, %v435
        %v468 = vsub.f32 %v306, %v436
        %v469 = vsub.f32 %v307, %v437
        %v470 = vsub.f32 %v308, %v438
        %v471 = vmul.f32 %v439, %v439
        %v472 = vmul.f32 %v440, %v440
        %v473 = vmul.f32 %v441, %v441
        %v474 = vmul.f32 %v442, %v442
        %v475 = vmul.f32 %v443, %v443
        %v476 = vmul.f32 %v444, %v444
        %v477 = vmul.f32 %v445, %v445
        %v478 = vmul.f32 %v446, %v446
        %v479 = vmul.f32 %v447, %v447
        %v480 = vmul.f32 %v448, %v448
        %v481 = vmul.f32 %v449, %v449
        %v482 = vmul.f32 %v450, %v450
        %v483 = vmul.f32 %v451, %v451
        %v484 = vmul.f32 %v452, %v452
        %v485 = vmul.f32 %v453, %v453
        %v486 = vmul.f32 %v454, %v454
        %v487 = vmul.f32 %v455, %v455
        %v488 = vmul.f32 %v456, %v456
        %v489 = vmul.f32 %v457, %v457
        %v490 = vmul.f32 %v458, %v458
        %v491 = vmul.f32 %v459, %v459
        %v492 = vmul.f32 %v460, %v460
        %v493 = vmul.f32 %v461, %v461
        %v494 = vmul.f32 %v462, %v462
        %v495 = vmul.f32 %v463, %v463
        %v496 = vmul.f32 %v464, %v464
        %v497 = vmul.f32 %v465, %v465
        %v498 = vmul.f32 %v466, %v466
        %v499 = vmul.f32 %v467, %v467
        %v500 = vmul.f32 %v468, %v468
        %v501 = vmul.f32 %v469, %v469
        %v502 = vmul.f32 %v470, %v470
        %v503 = vsel %vm309, %v471, 0.0
        %504 = vadd.xlane.f32.xlu0 %v503
        %v505 = vpop.xlane.xlu0 %504
        %v506 = vsel %vm309, %v472, 0.0
        %507 = vadd.xlane.f32.xlu0 %v506
        %v508 = vpop.xlane.xlu0 %507
        %v509 = vsel %vm309, %v473, 0.0
        %510 = vadd.xlane.f32.xlu0 %v509
        %v511 = vpop.xlane.xlu0 %510
        %v512 = vsel %vm309, %v474, 0.0
        %513 = vadd.xlane.f32.xlu0 %v512
        %v514 = vpop.xlane.xlu0 %513
        %v515 = vsel %vm309, %v475, 0.0
        %516 = vadd.xlane.f32.xlu0 %v515
        %v517 = vpop.xlane.xlu0 %516
        %v518 = vsel %vm309, %v476, 0.0
        %519 = vadd.xlane.f32.xlu0 %v518
        %v520 = vpop.xlane.xlu0 %519
        %v521 = vsel %vm309, %v477, 0.0
        %522 = vadd.xlane.f32.xlu0 %v521
        %v523 = vpop.xlane.xlu0 %522
        %v524 = vsel %vm309, %v478, 0.0
        %525 = vadd.xlane.f32.xlu0 %v524
        %v526 = vpop.xlane.xlu0 %525
        %v527 = vsel %vm309, %v479, 0.0
        %528 = vadd.xlane.f32.xlu0 %v527
        %v529 = vpop.xlane.xlu0 %528
        %v530 = vsel %vm309, %v480, 0.0
        %531 = vadd.xlane.f32.xlu0 %v530
        %v532 = vpop.xlane.xlu0 %531
        %v533 = vsel %vm309, %v481, 0.0
        %534 = vadd.xlane.f32.xlu0 %v533
        %v535 = vpop.xlane.xlu0 %534
        %v536 = vsel %vm309, %v482, 0.0
        %537 = vadd.xlane.f32.xlu0 %v536
        %v538 = vpop.xlane.xlu0 %537
        %v539 = vsel %vm309, %v483, 0.0
        %540 = vadd.xlane.f32.xlu0 %v539
        %v541 = vpop.xlane.xlu0 %540
        %v542 = vsel %vm309, %v484, 0.0
        %543 = vadd.xlane.f32.xlu0 %v542
        %v544 = vpop.xlane.xlu0 %543
        %v545 = vsel %vm309, %v485, 0.0
        %546 = vadd.xlane.f32.xlu0 %v545
        %v547 = vpop.xlane.xlu0 %546
        %v548 = vsel %vm309, %v486, 0.0
        %549 = vadd.xlane.f32.xlu0 %v548
        %v550 = vpop.xlane.xlu0 %549
        %v551 = vsel %vm309, %v487, 0.0
        %552 = vadd.xlane.f32.xlu0 %v551
        %v553 = vpop.xlane.xlu0 %552
        %v554 = vsel %vm309, %v488, 0.0
        %555 = vadd.xlane.f32.xlu0 %v554
        %v556 = vpop.xlane.xlu0 %555
        %v557 = vsel %vm309, %v489, 0.0
        %558 = vadd.xlane.f32.xlu0 %v557
        %v559 = vpop.xlane.xlu0 %558
        %v560 = vsel %vm309, %v490, 0.0
        %561 = vadd.xlane.f32.xlu0 %v560
        %v562 = vpop.xlane.xlu0 %561
        %v563 = vsel %vm309, %v491, 0.0
        %564 = vadd.xlane.f32.xlu0 %v563
        %v565 = vpop.xlane.xlu0 %564
        %v566 = vsel %vm309, %v492, 0.0
        %567 = vadd.xlane.f32.xlu0 %v566
        %v568 = vpop.xlane.xlu0 %567
        %v569 = vsel %vm309, %v493, 0.0
        %570 = vadd.xlane.f32.xlu0 %v569
        %v571 = vpop.xlane.xlu0 %570
        %v572 = vsel %vm309, %v494, 0.0
        %573 = vadd.xlane.f32.xlu0 %v572
        %v574 = vpop.xlane.xlu0 %573
        %v575 = vsel %vm309, %v495, 0.0
        %576 = vadd.xlane.f32.xlu0 %v575
        %v577 = vpop.xlane.xlu0 %576
        %v578 = vsel %vm309, %v496, 0.0
        %579 = vadd.xlane.f32.xlu0 %v578
        %v580 = vpop.xlane.xlu0 %579
        %v581 = vsel %vm309, %v497, 0.0
        %582 = vadd.xlane.f32.xlu0 %v581
        %v583 = vpop.xlane.xlu0 %582
        %v584 = vsel %vm309, %v498, 0.0
        %585 = vadd.xlane.f32.xlu0 %v584
        %v586 = vpop.xlane.xlu0 %585
        %v587 = vsel %vm309, %v499, 0.0
        %588 = vadd.xlane.f32.xlu0 %v587
        %v589 = vpop.xlane.xlu0 %588
        %v590 = vsel %vm309, %v500, 0.0
        %591 = vadd.xlane.f32.xlu0 %v590
        %v592 = vpop.xlane.xlu0 %591
        %v593 = vsel %vm309, %v501, 0.0
        %594 = vadd.xlane.f32.xlu0 %v593
        %v595 = vpop.xlane.xlu0 %594
        %v596 = vsel %vm309, %v502, 0.0
        %597 = vadd.xlane.f32.xlu0 %v596
        %v598 = vpop.xlane.xlu0 %597
        %v599 = vmul.f32 %v505, %v406
        %v600 = vmul.f32 %v508, %v406
        %v601 = vmul.f32 %v511, %v406
        %v602 = vmul.f32 %v514, %v406
        %v603 = vmul.f32 %v517, %v406
        %v604 = vmul.f32 %v520, %v406
        %v605 = vmul.f32 %v523, %v406
        %v606 = vmul.f32 %v526, %v406
        %v607 = vmul.f32 %v529, %v406
        %v608 = vmul.f32 %v532, %v406
        %v609 = vmul.f32 %v535, %v406
        %v610 = vmul.f32 %v538, %v406
        %v611 = vmul.f32 %v541, %v406
        %v612 = vmul.f32 %v544, %v406
        %v613 = vmul.f32 %v547, %v406
        %v614 = vmul.f32 %v550, %v406
        %v615 = vmul.f32 %v553, %v406
        %v616 = vmul.f32 %v556, %v406
        %v617 = vmul.f32 %v559, %v406
        %v618 = vmul.f32 %v562, %v406
        %v619 = vmul.f32 %v565, %v406
        %v620 = vmul.f32 %v568, %v406
        %v621 = vmul.f32 %v571, %v406
        %v622 = vmul.f32 %v574, %v406
        %v623 = vmul.f32 %v577, %v406
        %v624 = vmul.f32 %v580, %v406
        %v625 = vmul.f32 %v583, %v406
        %v626 = vmul.f32 %v586, %v406
        %v627 = vmul.f32 %v589, %v406
        %v628 = vmul.f32 %v592, %v406
        %v629 = vmul.f32 %v595, %v406
        %v630 = vmul.f32 %v598, %v406
        %v631 = vadd.f32 %v599, 1e-05
        %v632 = vadd.f32 %v600, 1e-05
        %v633 = vadd.f32 %v601, 1e-05
        %v634 = vadd.f32 %v602, 1e-05
        %v635 = vadd.f32 %v603, 1e-05
        %v636 = vadd.f32 %v604, 1e-05
        %v637 = vadd.f32 %v605, 1e-05
        %v638 = vadd.f32 %v606, 1e-05
        %v639 = vadd.f32 %v607, 1e-05
        %v640 = vadd.f32 %v608, 1e-05
        %v641 = vadd.f32 %v609, 1e-05
        %v642 = vadd.f32 %v610, 1e-05
        %v643 = vadd.f32 %v611, 1e-05
        %v644 = vadd.f32 %v612, 1e-05
        %v645 = vadd.f32 %v613, 1e-05
        %v646 = vadd.f32 %v614, 1e-05
        %v647 = vadd.f32 %v615, 1e-05
        %v648 = vadd.f32 %v616, 1e-05
        %v649 = vadd.f32 %v617, 1e-05
        %v650 = vadd.f32 %v618, 1e-05
        %v651 = vadd.f32 %v619, 1e-05
        %v652 = vadd.f32 %v620, 1e-05
        %v653 = vadd.f32 %v621, 1e-05
        %v654 = vadd.f32 %v622, 1e-05
        %v655 = vadd.f32 %v623, 1e-05
        %v656 = vadd.f32 %v624, 1e-05
        %v657 = vadd.f32 %v625, 1e-05
        %v658 = vadd.f32 %v626, 1e-05
        %v659 = vadd.f32 %v627, 1e-05
        %v660 = vadd.f32 %v628, 1e-05
        %v661 = vadd.f32 %v629, 1e-05
        %v662 = vadd.f32 %v630, 1e-05
        %v663 = vrsqrt.pop %v631
        %v664 = vrsqrt.pop %v632
        %v665 = vrsqrt.pop %v633
        %v666 = vrsqrt.pop %v634
        %v667 = vrsqrt.pop %v635
        %v668 = vrsqrt.pop %v636
        %v669 = vrsqrt.pop %v637
        %v670 = vrsqrt.pop %v638
        %v671 = vrsqrt.pop %v639
        %v672 = vrsqrt.pop %v640
        %v673 = vrsqrt.pop %v641
        %v674 = vrsqrt.pop %v642
        %v675 = vrsqrt.pop %v643
        %v676 = vrsqrt.pop %v644
        %v677 = vrsqrt.pop %v645
        %v678 = vrsqrt.pop %v646
        %v679 = vrsqrt.pop %v647
        %v680 = vrsqrt.pop %v648
        %v681 = vrsqrt.pop %v649
        %v682 = vrsqrt.pop %v650
        %v683 = vrsqrt.pop %v651
        %v684 = vrsqrt.pop %v652
        %v685 = vrsqrt.pop %v653
        %v686 = vrsqrt.pop %v654
        %v687 = vrsqrt.pop %v655
        %v688 = vrsqrt.pop %v656
        %v689 = vrsqrt.pop %v657
        %v690 = vrsqrt.pop %v658
        %v691 = vrsqrt.pop %v659
        %v692 = vrsqrt.pop %v660
        %v693 = vrsqrt.pop %v661
        %v694 = vrsqrt.pop %v662
        %v695 = vmul.f32 %v439, %v663
        %v696 = vmul.f32 %v440, %v664
        %v697 = vmul.f32 %v441, %v665
        %v698 = vmul.f32 %v442, %v666
        %v699 = vmul.f32 %v443, %v667
        %v700 = vmul.f32 %v444, %v668
        %v701 = vmul.f32 %v445, %v669
        %v702 = vmul.f32 %v446, %v670
        %v703 = vmul.f32 %v447, %v671
        %v704 = vmul.f32 %v448, %v672
        %v705 = vmul.f32 %v449, %v673
        %v706 = vmul.f32 %v450, %v674
        %v707 = vmul.f32 %v451, %v675
        %v708 = vmul.f32 %v452, %v676
        %v709 = vmul.f32 %v453, %v677
        %v710 = vmul.f32 %v454, %v678
        %v711 = vmul.f32 %v455, %v679
        %v712 = vmul.f32 %v456, %v680
        %v713 = vmul.f32 %v457, %v681
        %v714 = vmul.f32 %v458, %v682
        %v715 = vmul.f32 %v459, %v683
        %v716 = vmul.f32 %v460, %v684
        %v717 = vmul.f32 %v461, %v685
        %v718 = vmul.f32 %v462, %v686
        %v719 = vmul.f32 %v463, %v687
        %v720 = vmul.f32 %v464, %v688
        %v721 = vmul.f32 %v465, %v689
        %v722 = vmul.f32 %v466, %v690
        %v723 = vmul.f32 %v467, %v691
        %v724 = vmul.f32 %v468, %v692
        %v725 = vmul.f32 %v469, %v693
        %v726 = vmul.f32 %v470, %v694
        %v727 = vld [vmem:[%s1] sm:$0x1]
        %v729 = vlaneseq
        %v730 = vshrl.u32 %v729, 7
        %v731 = vsub.s32 0, %v730
        %v732 = vrot.slane %v727, %v731
        %v734 = vmul.f32 %v695, %v732
        %v735 = vmul.f32 %v696, %v732
        %v736 = vmul.f32 %v697, %v732
        %v737 = vmul.f32 %v698, %v732
        %v738 = vmul.f32 %v699, %v732
        %v739 = vmul.f32 %v700, %v732
        %v740 = vmul.f32 %v701, %v732
        %v741 = vmul.f32 %v702, %v732
        %v742 = vmul.f32 %v703, %v732
        %v743 = vmul.f32 %v704, %v732
        %v744 = vmul.f32 %v705, %v732
        %v745 = vmul.f32 %v706, %v732
        %v746 = vmul.f32 %v707, %v732
        %v747 = vmul.f32 %v708, %v732
        %v748 = vmul.f32 %v709, %v732
        %v749 = vmul.f32 %v710, %v732
        %v750 = vmul.f32 %v711, %v732
        %v751 = vmul.f32 %v712, %v732
        %v752 = vmul.f32 %v713, %v732
        %v753 = vmul.f32 %v714, %v732
        %v754 = vmul.f32 %v715, %v732
        %v755 = vmul.f32 %v716, %v732
        %v756 = vmul.f32 %v717, %v732
        %v757 = vmul.f32 %v718, %v732
        %v758 = vmul.f32 %v719, %v732
        %v759 = vmul.f32 %v720, %v732
        %v760 = vmul.f32 %v721, %v732
        %v761 = vmul.f32 %v722, %v732
        %v762 = vmul.f32 %v723, %v732
        %v763 = vmul.f32 %v724, %v732
        %v764 = vmul.f32 %v725, %v732
        %v765 = vmul.f32 %v726, %v732
        %v766 = vld [vmem:[%s2] sm:$0x1]
        %v768 = vlaneseq
        %v769 = vshrl.u32 %v768, 7
        %v770 = vsub.s32 0, %v769
        %v771 = vrot.slane %v766, %v770
        %v773 = vadd.f32 %v734, %v771
        %v774 = vadd.f32 %v735, %v771
        %v775 = vadd.f32 %v736, %v771
        %v776 = vadd.f32 %v737, %v771
        %v777 = vadd.f32 %v738, %v771
        %v778 = vadd.f32 %v739, %v771
        %v779 = vadd.f32 %v740, %v771
        %v780 = vadd.f32 %v741, %v771
        %v781 = vadd.f32 %v742, %v771
        %v782 = vadd.f32 %v743, %v771
        %v783 = vadd.f32 %v744, %v771
        %v784 = vadd.f32 %v745, %v771
        %v785 = vadd.f32 %v746, %v771
        %v786 = vadd.f32 %v747, %v771
        %v787 = vadd.f32 %v748, %v771
        %v788 = vadd.f32 %v749, %v771
        %v789 = vadd.f32 %v750, %v771
        %v790 = vadd.f32 %v751, %v771
        %v791 = vadd.f32 %v752, %v771
        %v792 = vadd.f32 %v753, %v771
        %v793 = vadd.f32 %v754, %v771
        %v794 = vadd.f32 %v755, %v771
        %v795 = vadd.f32 %v756, %v771
        %v796 = vadd.f32 %v757, %v771
        %v797 = vadd.f32 %v758, %v771
        %v798 = vadd.f32 %v759, %v771
        %v799 = vadd.f32 %v760, %v771
        %v800 = vadd.f32 %v761, %v771
        %v801 = vadd.f32 %v762, %v771
        %v802 = vadd.f32 %v763, %v771
        %v803 = vadd.f32 %v764, %v771
        %v804 = vadd.f32 %v765, %v771
        %v805 = vpack.c.bf16 %v774, %v773
        %v806 = vpack.c.bf16 %v776, %v775
        %v807 = vpack.c.bf16 %v778, %v777
        %v808 = vpack.c.bf16 %v780, %v779
        %v809 = vpack.c.bf16 %v782, %v781
        %v810 = vpack.c.bf16 %v784, %v783
        %v811 = vpack.c.bf16 %v786, %v785
        %v812 = vpack.c.bf16 %v788, %v787
        %v813 = vpack.c.bf16 %v790, %v789
        %v814 = vpack.c.bf16 %v792, %v791
        %v815 = vpack.c.bf16 %v794, %v793
        %v816 = vpack.c.bf16 %v796, %v795
        %v817 = vpack.c.bf16 %v798, %v797
        %v818 = vpack.c.bf16 %v800, %v799
        %v819 = vpack.c.bf16 %v802, %v801
        %v820 = vpack.c.bf16 %v804, %v803
        %v821 = vld [vmem:[%s6] sm:$0x7]
        %v822 = vld [vmem:[%s3] sm:$0xf]
        %v823 = vld [vmem:[%s3 + $0x4] sm:$0xf]
        %v824 = vld [vmem:[%s3 + $0x8] sm:$0xf]
        %v825 = vld [vmem:[%s3 + $0xc] sm:$0xf]
        %v826 = vlaneseq
        %v827 = vshrl.u32 %v826, 7
        %v828 = vsub.s32 0, %v827
        %v829 = vrot.slane %v821, %v828
        %v834 = vunpack.c.l.b16 %v822
        %v835 = vunpack.c.l.b16 %v823
        %v836 = vunpack.c.l.b16 %v824
        %v837 = vunpack.c.l.b16 %v825
        %v838 = vpack.c.b16 %v835, %v834
        %v839 = vpack.c.b16 %v837, %v836
        %v843 = vsel %vm309, %v805, 0
        %v846 = vsel %vm309, %v806, 0
        %v849 = vsel %vm309, %v807, 0
        %v852 = vsel %vm309, %v808, 0
        %v855 = vsel %vm309, %v809, 0
        %v858 = vsel %vm309, %v810, 0
        %v861 = vsel %vm309, %v811, 0
        %v864 = vsel %vm309, %v812, 0
        %v867 = vsel %vm309, %v813, 0
        %v870 = vsel %vm309, %v814, 0
        %v873 = vsel %vm309, %v815, 0
        %v876 = vsel %vm309, %v816, 0
        %v879 = vsel %vm309, %v817, 0
        %v882 = vsel %vm309, %v818, 0
        %v885 = vsel %vm309, %v819, 0
        %v888 = vsel %vm309, %v820, 0
        %890 = vmatprep.subr.bf16.mxu0 0
        %891 = vmatpush1.bf16.msra.mxu0 %v838
        %892 = vmatprep.subr.bf16.mxu0 0
        %893 = vmatpush1.bf16.msra.mxu0 %v839
        %894 = vmatprep.subr.bf16.mxu0 0
        %895 = vmatpush1.bf16.msra.mxu0 0
        %896 = vmatprep.subr.bf16.mxu0 0
        %897 = vmatpush1.bf16.msra.mxu0 0
        %898 = vmatprep.subr.bf16.mxu0 0
        %899 = vmatpush1.bf16.msra.mxu0 0
        %900 = vmatprep.subr.bf16.mxu0 0
        %901 = vmatpush1.bf16.msra.mxu0 0
        %902 = vmatprep.subr.bf16.mxu0 0
        %903 = vmatpush1.bf16.msra.mxu0 0
        %904 = vmatprep.subr.bf16.mxu0 0
        %905 = vmatpush1.bf16.msra.mxu0 0
        %906 = vmatprep.subr.bf16.mxu0 0
        %907 = vmatpush1.bf16.msra.mxu0 0
        %908 = vmatprep.subr.bf16.mxu0 0
        %909 = vmatpush1.bf16.msra.mxu0 0
        %910 = vmatprep.subr.bf16.mxu0 0
        %911 = vmatpush1.bf16.msra.mxu0 0
        %912 = vmatprep.subr.bf16.mxu0 0
        %913 = vmatpush1.bf16.msra.mxu0 0
        %914 = vmatprep.subr.bf16.mxu0 0
        %915 = vmatpush1.bf16.msra.mxu0 0
        %916 = vmatprep.subr.bf16.mxu0 0
        %917 = vmatpush1.bf16.msra.mxu0 0
        %918 = vmatprep.subr.bf16.mxu0 0
        %919 = vmatpush1.bf16.msra.mxu0 0
        %920 = vmatprep.subr.bf16.mxu0 0
        %921 = vmatpush1.bf16.msra.mxu0 0
        %922 = vmatprep.mubr.bf16.mxu0 0
        %923 = vmatmul.mubr.bf16.gmra.mrb[0].mxu0 %v843
        %v924 = vpop.f32.mrb[0].mxu0
        %v925 = vadd.f32 %v829, %v924
        %v926 = vpop.f32.mrb[0].mxu0
        %v927 = vpop.f32.mrb[0].mxu0
        %v928 = vadd.f32 %v829, %v927
        %v929 = vpop.f32.mrb[0].mxu0
        %930 = vmatprep.mubr.bf16.mxu0 0
        %931 = vmatmul.mubr.bf16.gmra.mrb[0].mxu0 %v846
        %v932 = vpop.f32.mrb[0].mxu0
        %v933 = vadd.f32 %v829, %v932
        %v934 = vpop.f32.mrb[0].mxu0
        %v935 = vpop.f32.mrb[0].mxu0
        %v936 = vadd.f32 %v829, %v935
        %v937 = vpop.f32.mrb[0].mxu0
        %938 = vmatprep.mubr.bf16.mxu0 0
        %939 = vmatmul.mubr.bf16.gmra.mrb[0].mxu0 %v849
        %v940 = vpop.f32.mrb[0].mxu0
        %v941 = vadd.f32 %v829, %v940
        %v942 = vpop.f32.mrb[0].mxu0
        %v943 = vpop.f32.mrb[0].mxu0
        %v944 = vadd.f32 %v829, %v943
        %v945 = vpop.f32.mrb[0].mxu0
        %946 = vmatprep.mubr.bf16.mxu0 0
        %947 = vmatmul.mubr.bf16.gmra.mrb[0].mxu0 %v852
        %v948 = vpop.f32.mrb[0].mxu0
        %v949 = vadd.f32 %v829, %v948
        %v950 = vpop.f32.mrb[0].mxu0
        %v951 = vpop.f32.mrb[0].mxu0
        %v952 = vadd.f32 %v829, %v951
        %v953 = vpop.f32.mrb[0].mxu0
        %954 = vmatprep.mubr.bf16.mxu0 0
        %955 = vmatmul.mubr.bf16.gmra.mrb[0].mxu0 %v855
        %v956 = vpop.f32.mrb[0].mxu0
        %v957 = vadd.f32 %v829, %v956
        %v958 = vpop.f32.mrb[0].mxu0
        %v959 = vpop.f32.mrb[0].mxu0
        %v960 = vadd.f32 %v829, %v959
        %v961 = vpop.f32.mrb[0].mxu0
        %962 = vmatprep.mubr.bf16.mxu0 0
        %963 = vmatmul.mubr.bf16.gmra.mrb[0].mxu0 %v858
        %v964 = vpop.f32.mrb[0].mxu0
        %v965 = vadd.f32 %v829, %v964
        %v966 = vpop.f32.mrb[0].mxu0
        %v967 = vpop.f32.mrb[0].mxu0
        %v968 = vadd.f32 %v829, %v967
        %v969 = vpop.f32.mrb[0].mxu0
        %970 = vmatprep.mubr.bf16.mxu0 0
        %971 = vmatmul.mubr.bf16.gmra.mrb[0].mxu0 %v861
        %v972 = vpop.f32.mrb[0].mxu0
        %v973 = vadd.f32 %v829, %v972
        %v974 = vpop.f32.mrb[0].mxu0
        %v975 = vpop.f32.mrb[0].mxu0
        %v976 = vadd.f32 %v829, %v975
        %v977 = vpop.f32.mrb[0].mxu0
        %978 = vmatprep.mubr.bf16.mxu0 0
        %979 = vmatmul.mubr.bf16.gmra.mrb[0].mxu0 %v864
        %v980 = vpop.f32.mrb[0].mxu0
        %v981 = vadd.f32 %v829, %v980
        %v982 = vpop.f32.mrb[0].mxu0
        %v983 = vpop.f32.mrb[0].mxu0
        %v984 = vadd.f32 %v829, %v983
        %v985 = vpop.f32.mrb[0].mxu0
        %986 = vmatprep.mubr.bf16.mxu0 0
        %987 = vmatmul.mubr.bf16.gmra.mrb[0].mxu0 %v867
        %v988 = vpop.f32.mrb[0].mxu0
        %v989 = vadd.f32 %v829, %v988
        %v990 = vpop.f32.mrb[0].mxu0
        %v991 = vpop.f32.mrb[0].mxu0
        %v992 = vadd.f32 %v829, %v991
        %v993 = vpop.f32.mrb[0].mxu0
        %994 = vmatprep.mubr.bf16.mxu0 0
        %995 = vmatmul.mubr.bf16.gmra.mrb[0].mxu0 %v870
        %v996 = vpop.f32.mrb[0].mxu0
        %v997 = vadd.f32 %v829, %v996
        %v998 = vpop.f32.mrb[0].mxu0
        %v999 = vpop.f32.mrb[0].mxu0
        %v1000 = vadd.f32 %v829, %v999
        %v1001 = vpop.f32.mrb[0].mxu0
        %1002 = vmatprep.mubr.bf16.mxu0 0
        %1003 = vmatmul.mubr.bf16.gmra.mrb[0].mxu0 %v873
        %v1004 = vpop.f32.mrb[0].mxu0
        %v1005 = vadd.f32 %v829, %v1004
        %v1006 = vpop.f32.mrb[0].mxu0
        %v1007 = vpop.f32.mrb[0].mxu0
        %v1008 = vadd.f32 %v829, %v1007
        %v1009 = vpop.f32.mrb[0].mxu0
        %1010 = vmatprep.mubr.bf16.mxu0 0
        %1011 = vmatmul.mubr.bf16.gmra.mrb[0].mxu0 %v876
        %v1012 = vpop.f32.mrb[0].mxu0
        %v1013 = vadd.f32 %v829, %v1012
        %v1014 = vpop.f32.mrb[0].mxu0
        %v1015 = vpop.f32.mrb[0].mxu0
        %v1016 = vadd.f32 %v829, %v1015
        %v1017 = vpop.f32.mrb[0].mxu0
        %1018 = vmatprep.mubr.bf16.mxu0 0
        %1019 = vmatmul.mubr.bf16.gmra.mrb[0].mxu0 %v879
        %v1020 = vpop.f32.mrb[0].mxu0
        %v1021 = vadd.f32 %v829, %v1020
        %v1022 = vpop.f32.mrb[0].mxu0
        %v1023 = vpop.f32.mrb[0].mxu0
        %v1024 = vadd.f32 %v829, %v1023
        %v1025 = vpop.f32.mrb[0].mxu0
        %1026 = vmatprep.mubr.bf16.mxu0 0
        %1027 = vmatmul.mubr.bf16.gmra.mrb[0].mxu0 %v882
        %v1028 = vpop.f32.mrb[0].mxu0
        %v1029 = vadd.f32 %v829, %v1028
        %v1030 = vpop.f32.mrb[0].mxu0
        %v1031 = vpop.f32.mrb[0].mxu0
        %v1032 = vadd.f32 %v829, %v1031
        %v1033 = vpop.f32.mrb[0].mxu0
        %1034 = vmatprep.mubr.bf16.mxu0 0
        %1035 = vmatmul.mubr.bf16.gmra.mrb[0].mxu0 %v885
        %v1036 = vpop.f32.mrb[0].mxu0
        %v1037 = vadd.f32 %v829, %v1036
        %v1038 = vpop.f32.mrb[0].mxu0
        %v1039 = vpop.f32.mrb[0].mxu0
        %v1040 = vadd.f32 %v829, %v1039
        %v1041 = vpop.f32.mrb[0].mxu0
        %1042 = vmatprep.mubr.bf16.mxu0 0
        %1043 = vmatmul.mubr.bf16.gmra.mrb[0].mxu0 %v888
        %v1044 = vpop.f32.mrb[0].mxu0
        %v1045 = vadd.f32 %v829, %v1044
        %v1046 = vpop.f32.mrb[0].mxu0
        %v1047 = vpop.f32.mrb[0].mxu0
        %v1048 = vadd.f32 %v829, %v1047
        %v1049 = vpop.f32.mrb[0].mxu0
        %1050 = vdwg.mxu0
        %v1051 = vpack.c.bf16 %v928, %v925
        %v1052 = vpack.c.bf16 %v936, %v933
        %v1053 = vpack.c.bf16 %v944, %v941
        %v1054 = vpack.c.bf16 %v952, %v949
        %v1055 = vpack.c.bf16 %v960, %v957
        %v1056 = vpack.c.bf16 %v968, %v965
        %v1057 = vpack.c.bf16 %v976, %v973
        %v1058 = vpack.c.bf16 %v984, %v981
        %v1059 = vpack.c.bf16 %v992, %v989
        %v1060 = vpack.c.bf16 %v1000, %v997
        %v1061 = vpack.c.bf16 %v1008, %v1005
        %v1062 = vpack.c.bf16 %v1016, %v1013
        %v1063 = vpack.c.bf16 %v1024, %v1021
        %v1064 = vpack.c.bf16 %v1032, %v1029
        %v1065 = vpack.c.bf16 %v1040, %v1037
        %v1066 = vpack.c.bf16 %v1048, %v1045
        %v1083 = vunpack.c.l.b16 %v1051
        %v1084 = vunpack.c.h.b16 %v1051
        %v1085 = vunpack.c.l.b16 %v1052
        %v1086 = vunpack.c.h.b16 %v1052
        %v1087 = vunpack.c.l.b16 %v1053
        %v1088 = vunpack.c.h.b16 %v1053
        %v1089 = vunpack.c.l.b16 %v1054
        %v1090 = vunpack.c.h.b16 %v1054
        %v1091 = vunpack.c.l.b16 %v1055
        %v1092 = vunpack.c.h.b16 %v1055
        %v1093 = vunpack.c.l.b16 %v1056
        %v1094 = vunpack.c.h.b16 %v1056
        %v1095 = vunpack.c.l.b16 %v1057
        %v1096 = vunpack.c.h.b16 %v1057
        %v1097 = vunpack.c.l.b16 %v1058
        %v1098 = vunpack.c.h.b16 %v1058
        %v1099 = vunpack.c.l.b16 %v1059
        %v1100 = vunpack.c.h.b16 %v1059
        %v1101 = vunpack.c.l.b16 %v1060
        %v1102 = vunpack.c.h.b16 %v1060
        %v1103 = vunpack.c.l.b16 %v1061
        %v1104 = vunpack.c.h.b16 %v1061
        %v1105 = vunpack.c.l.b16 %v1062
        %v1106 = vunpack.c.h.b16 %v1062
        %v1107 = vunpack.c.l.b16 %v1063
        %v1108 = vunpack.c.h.b16 %v1063
        %v1109 = vunpack.c.l.b16 %v1064
        %v1110 = vunpack.c.h.b16 %v1064
        %v1111 = vunpack.c.l.b16 %v1065
        %v1112 = vunpack.c.h.b16 %v1065
        %v1113 = vunpack.c.l.b16 %v1066
        %v1114 = vunpack.c.h.b16 %v1066
        %v1115 = vpack.c.b16 %v1083, %v1083
        %v1116 = vpack.c.b16 %v1084, %v1084
        %v1117 = vpack.c.b16 %v1085, %v1085
        %v1118 = vpack.c.b16 %v1086, %v1086
        %v1119 = vpack.c.b16 %v1087, %v1087
        %v1120 = vpack.c.b16 %v1088, %v1088
        %v1121 = vpack.c.b16 %v1089, %v1089
        %v1122 = vpack.c.b16 %v1090, %v1090
        %v1123 = vpack.c.b16 %v1091, %v1091
        %v1124 = vpack.c.b16 %v1092, %v1092
        %v1125 = vpack.c.b16 %v1093, %v1093
        %v1126 = vpack.c.b16 %v1094, %v1094
        %v1127 = vpack.c.b16 %v1095, %v1095
        %v1128 = vpack.c.b16 %v1096, %v1096
        %v1129 = vpack.c.b16 %v1097, %v1097
        %v1130 = vpack.c.b16 %v1098, %v1098
        %v1131 = vpack.c.b16 %v1099, %v1099
        %v1132 = vpack.c.b16 %v1100, %v1100
        %v1133 = vpack.c.b16 %v1101, %v1101
        %v1134 = vpack.c.b16 %v1102, %v1102
        %v1135 = vpack.c.b16 %v1103, %v1103
        %v1136 = vpack.c.b16 %v1104, %v1104
        %v1137 = vpack.c.b16 %v1105, %v1105
        %v1138 = vpack.c.b16 %v1106, %v1106
        %v1139 = vpack.c.b16 %v1107, %v1107
        %v1140 = vpack.c.b16 %v1108, %v1108
        %v1141 = vpack.c.b16 %v1109, %v1109
        %v1142 = vpack.c.b16 %v1110, %v1110
        %v1143 = vpack.c.b16 %v1111, %v1111
        %v1144 = vpack.c.b16 %v1112, %v1112
        %v1145 = vpack.c.b16 %v1113, %v1113
        %v1146 = vpack.c.b16 %v1114, %v1114
        %vm1179 = vcmask 257024
        %1180 = vst.msk [vmem:[%s268] sm:$0xf] %vm1179, %v1115
        %1181 = vst.msk [vmem:[%s268 + $0x4] sm:$0xf] %vm1179, %v1116
        %1182 = vst.msk [vmem:[%s268 + $0x8] sm:$0xf] %vm1179, %v1117
        %1183 = vst.msk [vmem:[%s268 + $0xc] sm:$0xf] %vm1179, %v1118
        %1184 = vst.msk [vmem:[%s268 + $0x10] sm:$0xf] %vm1179, %v1119
        %1185 = vst.msk [vmem:[%s268 + $0x14] sm:$0xf] %vm1179, %v1120
        %1186 = vst.msk [vmem:[%s268 + $0x18] sm:$0xf] %vm1179, %v1121
        %1187 = vst.msk [vmem:[%s268 + $0x1c] sm:$0xf] %vm1179, %v1122
        %1188 = vst.msk [vmem:[%s268 + $0x20] sm:$0xf] %vm1179, %v1123
        %1189 = vst.msk [vmem:[%s268 + $0x24] sm:$0xf] %vm1179, %v1124
        %1190 = vst.msk [vmem:[%s268 + $0x28] sm:$0xf] %vm1179, %v1125
        %1191 = vst.msk [vmem:[%s268 + $0x2c] sm:$0xf] %vm1179, %v1126
        %1192 = vst.msk [vmem:[%s268 + $0x30] sm:$0xf] %vm1179, %v1127
        %1193 = vst.msk [vmem:[%s268 + $0x34] sm:$0xf] %vm1179, %v1128
        %1194 = vst.msk [vmem:[%s268 + $0x38] sm:$0xf] %vm1179, %v1129
        %1195 = vst.msk [vmem:[%s268 + $0x3c] sm:$0xf] %vm1179, %v1130
        %1196 = vst.msk [vmem:[%s268 + $0x40] sm:$0xf] %vm1179, %v1131
        %1197 = vst.msk [vmem:[%s268 + $0x44] sm:$0xf] %vm1179, %v1132
        %1198 = vst.msk [vmem:[%s268 + $0x48] sm:$0xf] %vm1179, %v1133
        %1199 = vst.msk [vmem:[%s268 + $0x4c] sm:$0xf] %vm1179, %v1134
        %1200 = vst.msk [vmem:[%s268 + $0x50] sm:$0xf] %vm1179, %v1135
        %1201 = vst.msk [vmem:[%s268 + $0x54] sm:$0xf] %vm1179, %v1136
        %1202 = vst.msk [vmem:[%s268 + $0x58] sm:$0xf] %vm1179, %v1137
        %1203 = vst.msk [vmem:[%s268 + $0x5c] sm:$0xf] %vm1179, %v1138
        %1204 = vst.msk [vmem:[%s268 + $0x60] sm:$0xf] %vm1179, %v1139
        %1205 = vst.msk [vmem:[%s268 + $0x64] sm:$0xf] %vm1179, %v1140
        %1206 = vst.msk [vmem:[%s268 + $0x68] sm:$0xf] %vm1179, %v1141
        %1207 = vst.msk [vmem:[%s268 + $0x6c] sm:$0xf] %vm1179, %v1142
        %1208 = vst.msk [vmem:[%s268 + $0x70] sm:$0xf] %vm1179, %v1143
        %1209 = vst.msk [vmem:[%s268 + $0x74] sm:$0xf] %vm1179, %v1144
        %1210 = vst.msk [vmem:[%s268 + $0x78] sm:$0xf] %vm1179, %v1145
        %1211 = vst.msk [vmem:[%s268 + $0x7c] sm:$0xf] %vm1179, %v1146
        %v1212 = vld [vmem:[%s4] sm:$0xf]
        %v1213 = vld [vmem:[%s4 + $0x4] sm:$0xf]
        %v1214 = vld [vmem:[%s4 + $0x8] sm:$0xf]
        %v1215 = vld [vmem:[%s4 + $0xc] sm:$0xf]
        %v1216 = vlaneseq
        %v1217 = vshrl.u32 %v1216, 7
        %v1218 = vsub.s32 1, %v1217
        %v1219 = vrot.slane %v821, %v1218
        %v1224 = vunpack.c.l.b16 %v1212
        %v1225 = vunpack.c.l.b16 %v1213
        %v1226 = vunpack.c.l.b16 %v1214
        %v1227 = vunpack.c.l.b16 %v1215
        %v1228 = vpack.c.b16 %v1225, %v1224
        %v1229 = vpack.c.b16 %v1227, %v1226
        %1232 = vmatprep.subr.bf16.mxu0 0
        %1233 = vmatpush1.bf16.msra.mxu0 %v1228
        %1234 = vmatprep.subr.bf16.mxu0 0
        %1235 = vmatpush1.bf16.msra.mxu0 %v1229
        %1236 = vmatprep.subr.bf16.mxu0 0
        %1237 = vmatpush1.bf16.msra.mxu0 0
        %1238 = vmatprep.subr.bf16.mxu0 0
        %1239 = vmatpush1.bf16.msra.mxu0 0
        %1240 = vmatprep.subr.bf16.mxu0 0
        %1241 = vmatpush1.bf16.msra.mxu0 0
        %1242 = vmatprep.subr.bf16.mxu0 0
        %1243 = vmatpush1.bf16.msra.mxu0 0
        %1244 = vmatprep.subr.bf16.mxu0 0
        %1245 = vmatpush1.bf16.msra.mxu0 0
        %1246 = vmatprep.subr.bf16.mxu0 0
        %1247 = vmatpush1.bf16.msra.mxu0 0
        %1248 = vmatprep.subr.bf16.mxu0 0
        %1249 = vmatpush1.bf16.msra.mxu0 0
        %1250 = vmatprep.subr.bf16.mxu0 0
        %1251 = vmatpush1.bf16.msra.mxu0 0
        %1252 = vmatprep.subr.bf16.mxu0 0
        %1253 = vmatpush1.bf16.msra.mxu0 0
        %1254 = vmatprep.subr.bf16.mxu0 0
        %1255 = vmatpush1.bf16.msra.mxu0 0
        %1256 = vmatprep.subr.bf16.mxu0 0
        %1257 = vmatpush1.bf16.msra.mxu0 0
        %1258 = vmatprep.subr.bf16.mxu0 0
        %1259 = vmatpush1.bf16.msra.mxu0 0
        %1260 = vmatprep.subr.bf16.mxu0 0
        %1261 = vmatpush1.bf16.msra.mxu0 0
        %1262 = vmatprep.subr.bf16.mxu0 0
        %1263 = vmatpush1.bf16.msra.mxu0 0
        %1264 = vmatprep.mubr.bf16.mxu0 0
        %1265 = vmatmul.mubr.bf16.gmra.mrb[0].mxu0 %v843
        %v1266 = vpop.f32.mrb[0].mxu0
        %v1267 = vadd.f32 %v1219, %v1266
        %v1268 = vpop.f32.mrb[0].mxu0
        %v1269 = vpop.f32.mrb[0].mxu0
        %v1270 = vadd.f32 %v1219, %v1269
        %v1271 = vpop.f32.mrb[0].mxu0
        %1272 = vmatprep.mubr.bf16.mxu0 0
        %1273 = vmatmul.mubr.bf16.gmra.mrb[0].mxu0 %v846
        %v1274 = vpop.f32.mrb[0].mxu0
        %v1275 = vadd.f32 %v1219, %v1274
        %v1276 = vpop.f32.mrb[0].mxu0
        %v1277 = vpop.f32.mrb[0].mxu0
        %v1278 = vadd.f32 %v1219, %v1277
        %v1279 = vpop.f32.mrb[0].mxu0
        %1280 = vmatprep.mubr.bf16.mxu0 0
        %1281 = vmatmul.mubr.bf16.gmra.mrb[0].mxu0 %v849
        %v1282 = vpop.f32.mrb[0].mxu0
        %v1283 = vadd.f32 %v1219, %v1282
        %v1284 = vpop.f32.mrb[0].mxu0
        %v1285 = vpop.f32.mrb[0].mxu0
        %v1286 = vadd.f32 %v1219, %v1285
        %v1287 = vpop.f32.mrb[0].mxu0
        %1288 = vmatprep.mubr.bf16.mxu0 0
        %1289 = vmatmul.mubr.bf16.gmra.mrb[0].mxu0 %v852
        %v1290 = vpop.f32.mrb[0].mxu0
        %v1291 = vadd.f32 %v1219, %v1290
        %v1292 = vpop.f32.mrb[0].mxu0
        %v1293 = vpop.f32.mrb[0].mxu0
        %v1294 = vadd.f32 %v1219, %v1293
        %v1295 = vpop.f32.mrb[0].mxu0
        %1296 = vmatprep.mubr.bf16.mxu0 0
        %1297 = vmatmul.mubr.bf16.gmra.mrb[0].mxu0 %v855
        %v1298 = vpop.f32.mrb[0].mxu0
        %v1299 = vadd.f32 %v1219, %v1298
        %v1300 = vpop.f32.mrb[0].mxu0
        %v1301 = vpop.f32.mrb[0].mxu0
        %v1302 = vadd.f32 %v1219, %v1301
        %v1303 = vpop.f32.mrb[0].mxu0
        %1304 = vmatprep.mubr.bf16.mxu0 0
        %1305 = vmatmul.mubr.bf16.gmra.mrb[0].mxu0 %v858
        %v1306 = vpop.f32.mrb[0].mxu0
        %v1307 = vadd.f32 %v1219, %v1306
        %v1308 = vpop.f32.mrb[0].mxu0
        %v1309 = vpop.f32.mrb[0].mxu0
        %v1310 = vadd.f32 %v1219, %v1309
        %v1311 = vpop.f32.mrb[0].mxu0
        %1312 = vmatprep.mubr.bf16.mxu0 0
        %1313 = vmatmul.mubr.bf16.gmra.mrb[0].mxu0 %v861
        %v1314 = vpop.f32.mrb[0].mxu0
        %v1315 = vadd.f32 %v1219, %v1314
        %v1316 = vpop.f32.mrb[0].mxu0
        %v1317 = vpop.f32.mrb[0].mxu0
        %v1318 = vadd.f32 %v1219, %v1317
        %v1319 = vpop.f32.mrb[0].mxu0
        %1320 = vmatprep.mubr.bf16.mxu0 0
        %1321 = vmatmul.mubr.bf16.gmra.mrb[0].mxu0 %v864
        %v1322 = vpop.f32.mrb[0].mxu0
        %v1323 = vadd.f32 %v1219, %v1322
        %v1324 = vpop.f32.mrb[0].mxu0
        %v1325 = vpop.f32.mrb[0].mxu0
        %v1326 = vadd.f32 %v1219, %v1325
        %v1327 = vpop.f32.mrb[0].mxu0
        %1328 = vmatprep.mubr.bf16.mxu0 0
        %1329 = vmatmul.mubr.bf16.gmra.mrb[0].mxu0 %v867
        %v1330 = vpop.f32.mrb[0].mxu0
        %v1331 = vadd.f32 %v1219, %v1330
        %v1332 = vpop.f32.mrb[0].mxu0
        %v1333 = vpop.f32.mrb[0].mxu0
        %v1334 = vadd.f32 %v1219, %v1333
        %v1335 = vpop.f32.mrb[0].mxu0
        %1336 = vmatprep.mubr.bf16.mxu0 0
        %1337 = vmatmul.mubr.bf16.gmra.mrb[0].mxu0 %v870
        %v1338 = vpop.f32.mrb[0].mxu0
        %v1339 = vadd.f32 %v1219, %v1338
        %v1340 = vpop.f32.mrb[0].mxu0
        %v1341 = vpop.f32.mrb[0].mxu0
        %v1342 = vadd.f32 %v1219, %v1341
        %v1343 = vpop.f32.mrb[0].mxu0
        %1344 = vmatprep.mubr.bf16.mxu0 0
        %1345 = vmatmul.mubr.bf16.gmra.mrb[0].mxu0 %v873
        %v1346 = vpop.f32.mrb[0].mxu0
        %v1347 = vadd.f32 %v1219, %v1346
        %v1348 = vpop.f32.mrb[0].mxu0
        %v1349 = vpop.f32.mrb[0].mxu0
        %v1350 = vadd.f32 %v1219, %v1349
        %v1351 = vpop.f32.mrb[0].mxu0
        %1352 = vmatprep.mubr.bf16.mxu0 0
        %1353 = vmatmul.mubr.bf16.gmra.mrb[0].mxu0 %v876
        %v1354 = vpop.f32.mrb[0].mxu0
        %v1355 = vadd.f32 %v1219, %v1354
        %v1356 = vpop.f32.mrb[0].mxu0
        %v1357 = vpop.f32.mrb[0].mxu0
        %v1358 = vadd.f32 %v1219, %v1357
        %v1359 = vpop.f32.mrb[0].mxu0
        %1360 = vmatprep.mubr.bf16.mxu0 0
        %1361 = vmatmul.mubr.bf16.gmra.mrb[0].mxu0 %v879
        %v1362 = vpop.f32.mrb[0].mxu0
        %v1363 = vadd.f32 %v1219, %v1362
        %v1364 = vpop.f32.mrb[0].mxu0
        %v1365 = vpop.f32.mrb[0].mxu0
        %v1366 = vadd.f32 %v1219, %v1365
        %v1367 = vpop.f32.mrb[0].mxu0
        %1368 = vmatprep.mubr.bf16.mxu0 0
        %1369 = vmatmul.mubr.bf16.gmra.mrb[0].mxu0 %v882
        %v1370 = vpop.f32.mrb[0].mxu0
        %v1371 = vadd.f32 %v1219, %v1370
        %v1372 = vpop.f32.mrb[0].mxu0
        %v1373 = vpop.f32.mrb[0].mxu0
        %v1374 = vadd.f32 %v1219, %v1373
        %v1375 = vpop.f32.mrb[0].mxu0
        %1376 = vmatprep.mubr.bf16.mxu0 0
        %1377 = vmatmul.mubr.bf16.gmra.mrb[0].mxu0 %v885
        %v1378 = vpop.f32.mrb[0].mxu0
        %v1379 = vadd.f32 %v1219, %v1378
        %v1380 = vpop.f32.mrb[0].mxu0
        %v1381 = vpop.f32.mrb[0].mxu0
        %v1382 = vadd.f32 %v1219, %v1381
        %v1383 = vpop.f32.mrb[0].mxu0
        %1384 = vmatprep.mubr.bf16.mxu0 0
        %1385 = vmatmul.mubr.bf16.gmra.mrb[0].mxu0 %v888
        %v1386 = vpop.f32.mrb[0].mxu0
        %v1387 = vadd.f32 %v1219, %v1386
        %v1388 = vpop.f32.mrb[0].mxu0
        %v1389 = vpop.f32.mrb[0].mxu0
        %v1390 = vadd.f32 %v1219, %v1389
        %v1391 = vpop.f32.mrb[0].mxu0
        %1392 = vdwg.mxu0
        %v1393 = vpack.c.bf16 %v1270, %v1267
        %v1394 = vpack.c.bf16 %v1278, %v1275
        %v1395 = vpack.c.bf16 %v1286, %v1283
        %v1396 = vpack.c.bf16 %v1294, %v1291
        %v1397 = vpack.c.bf16 %v1302, %v1299
        %v1398 = vpack.c.bf16 %v1310, %v1307
        %v1399 = vpack.c.bf16 %v1318, %v1315
        %v1400 = vpack.c.bf16 %v1326, %v1323
        %v1401 = vpack.c.bf16 %v1334, %v1331
        %v1402 = vpack.c.bf16 %v1342, %v1339
        %v1403 = vpack.c.bf16 %v1350, %v1347
        %v1404 = vpack.c.bf16 %v1358, %v1355
        %v1405 = vpack.c.bf16 %v1366, %v1363
        %v1406 = vpack.c.bf16 %v1374, %v1371
        %v1407 = vpack.c.bf16 %v1382, %v1379
        %v1408 = vpack.c.bf16 %v1390, %v1387
        %v1425 = vunpack.c.l.b16 %v1393
        %v1426 = vunpack.c.h.b16 %v1393
        %v1427 = vunpack.c.l.b16 %v1394
        %v1428 = vunpack.c.h.b16 %v1394
        %v1429 = vunpack.c.l.b16 %v1395
        %v1430 = vunpack.c.h.b16 %v1395
        %v1431 = vunpack.c.l.b16 %v1396
        %v1432 = vunpack.c.h.b16 %v1396
        %v1433 = vunpack.c.l.b16 %v1397
        %v1434 = vunpack.c.h.b16 %v1397
        %v1435 = vunpack.c.l.b16 %v1398
        %v1436 = vunpack.c.h.b16 %v1398
        %v1437 = vunpack.c.l.b16 %v1399
        %v1438 = vunpack.c.h.b16 %v1399
        %v1439 = vunpack.c.l.b16 %v1400
        %v1440 = vunpack.c.h.b16 %v1400
        %v1441 = vunpack.c.l.b16 %v1401
        %v1442 = vunpack.c.h.b16 %v1401
        %v1443 = vunpack.c.l.b16 %v1402
        %v1444 = vunpack.c.h.b16 %v1402
        %v1445 = vunpack.c.l.b16 %v1403
        %v1446 = vunpack.c.h.b16 %v1403
        %v1447 = vunpack.c.l.b16 %v1404
        %v1448 = vunpack.c.h.b16 %v1404
        %v1449 = vunpack.c.l.b16 %v1405
        %v1450 = vunpack.c.h.b16 %v1405
        %v1451 = vunpack.c.l.b16 %v1406
        %v1452 = vunpack.c.h.b16 %v1406
        %v1453 = vunpack.c.l.b16 %v1407
        %v1454 = vunpack.c.h.b16 %v1407
        %v1455 = vunpack.c.l.b16 %v1408
        %v1456 = vunpack.c.h.b16 %v1408
        %v1457 = vpack.c.b16 %v1425, %v1425
        %v1458 = vpack.c.b16 %v1426, %v1426
        %v1459 = vpack.c.b16 %v1427, %v1427
        %v1460 = vpack.c.b16 %v1428, %v1428
        %v1461 = vpack.c.b16 %v1429, %v1429
        %v1462 = vpack.c.b16 %v1430, %v1430
        %v1463 = vpack.c.b16 %v1431, %v1431
        %v1464 = vpack.c.b16 %v1432, %v1432
        %v1465 = vpack.c.b16 %v1433, %v1433
        %v1466 = vpack.c.b16 %v1434, %v1434
        %v1467 = vpack.c.b16 %v1435, %v1435
        %v1468 = vpack.c.b16 %v1436, %v1436
        %v1469 = vpack.c.b16 %v1437, %v1437
        %v1470 = vpack.c.b16 %v1438, %v1438
        %v1471 = vpack.c.b16 %v1439, %v1439
        %v1472 = vpack.c.b16 %v1440, %v1440
        %v1473 = vpack.c.b16 %v1441, %v1441
        %v1474 = vpack.c.b16 %v1442, %v1442
        %v1475 = vpack.c.b16 %v1443, %v1443
        %v1476 = vpack.c.b16 %v1444, %v1444
        %v1477 = vpack.c.b16 %v1445, %v1445
        %v1478 = vpack.c.b16 %v1446, %v1446
        %v1479 = vpack.c.b16 %v1447, %v1447
        %v1480 = vpack.c.b16 %v1448, %v1448
        %v1481 = vpack.c.b16 %v1449, %v1449
        %v1482 = vpack.c.b16 %v1450, %v1450
        %v1483 = vpack.c.b16 %v1451, %v1451
        %v1484 = vpack.c.b16 %v1452, %v1452
        %v1485 = vpack.c.b16 %v1453, %v1453
        %v1486 = vpack.c.b16 %v1454, %v1454
        %v1487 = vpack.c.b16 %v1455, %v1455
        %v1488 = vpack.c.b16 %v1456, %v1456
        %s1521 = scalar_lea.vmem %s268, 128 [#allocation2]
        %1522 = vst.msk [vmem:[%s1521] sm:$0xf] %vm1179, %v1457
        %1523 = vst.msk [vmem:[%s1521 + $0x4] sm:$0xf] %vm1179, %v1458
        %1524 = vst.msk [vmem:[%s1521 + $0x8] sm:$0xf] %vm1179, %v1459
        %1525 = vst.msk [vmem:[%s1521 + $0xc] sm:$0xf] %vm1179, %v1460
        %1526 = vst.msk [vmem:[%s1521 + $0x10] sm:$0xf] %vm1179, %v1461
        %1527 = vst.msk [vmem:[%s1521 + $0x14] sm:$0xf] %vm1179, %v1462
        %1528 = vst.msk [vmem:[%s1521 + $0x18] sm:$0xf] %vm1179, %v1463
        %1529 = vst.msk [vmem:[%s1521 + $0x1c] sm:$0xf] %vm1179, %v1464
        %1530 = vst.msk [vmem:[%s1521 + $0x20] sm:$0xf] %vm1179, %v1465
        %1531 = vst.msk [vmem:[%s1521 + $0x24] sm:$0xf] %vm1179, %v1466
        %1532 = vst.msk [vmem:[%s1521 + $0x28] sm:$0xf] %vm1179, %v1467
        %1533 = vst.msk [vmem:[%s1521 + $0x2c] sm:$0xf] %vm1179, %v1468
        %1534 = vst.msk [vmem:[%s1521 + $0x30] sm:$0xf] %vm1179, %v1469
        %1535 = vst.msk [vmem:[%s1521 + $0x34] sm:$0xf] %vm1179, %v1470
        %1536 = vst.msk [vmem:[%s1521 + $0x38] sm:$0xf] %vm1179, %v1471
        %1537 = vst.msk [vmem:[%s1521 + $0x3c] sm:$0xf] %vm1179, %v1472
        %1538 = vst.msk [vmem:[%s1521 + $0x40] sm:$0xf] %vm1179, %v1473
        %1539 = vst.msk [vmem:[%s1521 + $0x44] sm:$0xf] %vm1179, %v1474
        %1540 = vst.msk [vmem:[%s1521 + $0x48] sm:$0xf] %vm1179, %v1475
        %1541 = vst.msk [vmem:[%s1521 + $0x4c] sm:$0xf] %vm1179, %v1476
        %1542 = vst.msk [vmem:[%s1521 + $0x50] sm:$0xf] %vm1179, %v1477
        %1543 = vst.msk [vmem:[%s1521 + $0x54] sm:$0xf] %vm1179, %v1478
        %1544 = vst.msk [vmem:[%s1521 + $0x58] sm:$0xf] %vm1179, %v1479
        %1545 = vst.msk [vmem:[%s1521 + $0x5c] sm:$0xf] %vm1179, %v1480
        %1546 = vst.msk [vmem:[%s1521 + $0x60] sm:$0xf] %vm1179, %v1481
        %1547 = vst.msk [vmem:[%s1521 + $0x64] sm:$0xf] %vm1179, %v1482
        %1548 = vst.msk [vmem:[%s1521 + $0x68] sm:$0xf] %vm1179, %v1483
        %1549 = vst.msk [vmem:[%s1521 + $0x6c] sm:$0xf] %vm1179, %v1484
        %1550 = vst.msk [vmem:[%s1521 + $0x70] sm:$0xf] %vm1179, %v1485
        %1551 = vst.msk [vmem:[%s1521 + $0x74] sm:$0xf] %vm1179, %v1486
        %1552 = vst.msk [vmem:[%s1521 + $0x78] sm:$0xf] %vm1179, %v1487
        %1553 = vst.msk [vmem:[%s1521 + $0x7c] sm:$0xf] %vm1179, %v1488
        %v1554 = vld [vmem:[%s5] sm:$0xf]
        %v1555 = vld [vmem:[%s5 + $0x4] sm:$0xf]
        %v1556 = vld [vmem:[%s5 + $0x8] sm:$0xf]
        %v1557 = vld [vmem:[%s5 + $0xc] sm:$0xf]
        %v1558 = vlaneseq
        %v1559 = vshrl.u32 %v1558, 7
        %v1560 = vsub.s32 2, %v1559
        %v1561 = vrot.slane %v821, %v1560
        %v1566 = vunpack.c.l.b16 %v1554
        %v1567 = vunpack.c.l.b16 %v1555
        %v1568 = vunpack.c.l.b16 %v1556
        %v1569 = vunpack.c.l.b16 %v1557
        %v1570 = vpack.c.b16 %v1567, %v1566
        %v1571 = vpack.c.b16 %v1569, %v1568
        %1574 = vmatprep.subr.bf16.mxu0 0
        %1575 = vmatpush1.bf16.msra.mxu0 %v1570
        %1576 = vmatprep.subr.bf16.mxu0 0
        %1577 = vmatpush1.bf16.msra.mxu0 %v1571
        %1578 = vmatprep.subr.bf16.mxu0 0
        %1579 = vmatpush1.bf16.msra.mxu0 0
        %1580 = vmatprep.subr.bf16.mxu0 0
        %1581 = vmatpush1.bf16.msra.mxu0 0
        %1582 = vmatprep.subr.bf16.mxu0 0
        %1583 = vmatpush1.bf16.msra.mxu0 0
        %1584 = vmatprep.subr.bf16.mxu0 0
        %1585 = vmatpush1.bf16.msra.mxu0 0
        %1586 = vmatprep.subr.bf16.mxu0 0
        %1587 = vmatpush1.bf16.msra.mxu0 0
        %1588 = vmatprep.subr.bf16.mxu0 0
        %1589 = vmatpush1.bf16.msra.mxu0 0
        %1590 = vmatprep.subr.bf16.mxu0 0
        %1591 = vmatpush1.bf16.msra.mxu0 0
        %1592 = vmatprep.subr.bf16.mxu0 0
        %1593 = vmatpush1.bf16.msra.mxu0 0
        %1594 = vmatprep.subr.bf16.mxu0 0
        %1595 = vmatpush1.bf16.msra.mxu0 0
        %1596 = vmatprep.subr.bf16.mxu0 0
        %1597 = vmatpush1.bf16.msra.mxu0 0
        %1598 = vmatprep.subr.bf16.mxu0 0
        %1599 = vmatpush1.bf16.msra.mxu0 0
        %1600 = vmatprep.subr.bf16.mxu0 0
        %1601 = vmatpush1.bf16.msra.mxu0 0
        %1602 = vmatprep.subr.bf16.mxu0 0
        %1603 = vmatpush1.bf16.msra.mxu0 0
        %1604 = vmatprep.subr.bf16.mxu0 0
        %1605 = vmatpush1.bf16.msra.mxu0 0
        %1606 = vmatprep.mubr.bf16.mxu0 0
        %1607 = vmatmul.mubr.bf16.gmra.mrb[0].mxu0 %v843
        %v1608 = vpop.f32.mrb[0].mxu0
        %v1609 = vadd.f32 %v1561, %v1608
        %v1610 = vpop.f32.mrb[0].mxu0
        %v1611 = vpop.f32.mrb[0].mxu0
        %v1612 = vadd.f32 %v1561, %v1611
        %v1613 = vpop.f32.mrb[0].mxu0
        %1614 = vmatprep.mubr.bf16.mxu0 0
        %1615 = vmatmul.mubr.bf16.gmra.mrb[0].mxu0 %v846
        %v1616 = vpop.f32.mrb[0].mxu0
        %v1617 = vadd.f32 %v1561, %v1616
        %v1618 = vpop.f32.mrb[0].mxu0
        %v1619 = vpop.f32.mrb[0].mxu0
        %v1620 = vadd.f32 %v1561, %v1619
        %v1621 = vpop.f32.mrb[0].mxu0
        %1622 = vmatprep.mubr.bf16.mxu0 0
        %1623 = vmatmul.mubr.bf16.gmra.mrb[0].mxu0 %v849
        %v1624 = vpop.f32.mrb[0].mxu0
        %v1625 = vadd.f32 %v1561, %v1624
        %v1626 = vpop.f32.mrb[0].mxu0
        %v1627 = vpop.f32.mrb[0].mxu0
        %v1628 = vadd.f32 %v1561, %v1627
        %v1629 = vpop.f32.mrb[0].mxu0
        %1630 = vmatprep.mubr.bf16.mxu0 0
        %1631 = vmatmul.mubr.bf16.gmra.mrb[0].mxu0 %v852
        %v1632 = vpop.f32.mrb[0].mxu0
        %v1633 = vadd.f32 %v1561, %v1632
        %v1634 = vpop.f32.mrb[0].mxu0
        %v1635 = vpop.f32.mrb[0].mxu0
        %v1636 = vadd.f32 %v1561, %v1635
        %v1637 = vpop.f32.mrb[0].mxu0
        %1638 = vmatprep.mubr.bf16.mxu0 0
        %1639 = vmatmul.mubr.bf16.gmra.mrb[0].mxu0 %v855
        %v1640 = vpop.f32.mrb[0].mxu0
        %v1641 = vadd.f32 %v1561, %v1640
        %v1642 = vpop.f32.mrb[0].mxu0
        %v1643 = vpop.f32.mrb[0].mxu0
        %v1644 = vadd.f32 %v1561, %v1643
        %v1645 = vpop.f32.mrb[0].mxu0
        %1646 = vmatprep.mubr.bf16.mxu0 0
        %1647 = vmatmul.mubr.bf16.gmra.mrb[0].mxu0 %v858
        %v1648 = vpop.f32.mrb[0].mxu0
        %v1649 = vadd.f32 %v1561, %v1648
        %v1650 = vpop.f32.mrb[0].mxu0
        %v1651 = vpop.f32.mrb[0].mxu0
        %v1652 = vadd.f32 %v1561, %v1651
        %v1653 = vpop.f32.mrb[0].mxu0
        %1654 = vmatprep.mubr.bf16.mxu0 0
        %1655 = vmatmul.mubr.bf16.gmra.mrb[0].mxu0 %v861
        %v1656 = vpop.f32.mrb[0].mxu0
        %v1657 = vadd.f32 %v1561, %v1656
        %v1658 = vpop.f32.mrb[0].mxu0
        %v1659 = vpop.f32.mrb[0].mxu0
        %v1660 = vadd.f32 %v1561, %v1659
        %v1661 = vpop.f32.mrb[0].mxu0
        %1662 = vmatprep.mubr.bf16.mxu0 0
        %1663 = vmatmul.mubr.bf16.gmra.mrb[0].mxu0 %v864
        %v1664 = vpop.f32.mrb[0].mxu0
        %v1665 = vadd.f32 %v1561, %v1664
        %v1666 = vpop.f32.mrb[0].mxu0
        %v1667 = vpop.f32.mrb[0].mxu0
        %v1668 = vadd.f32 %v1561, %v1667
        %v1669 = vpop.f32.mrb[0].mxu0
        %1670 = vmatprep.mubr.bf16.mxu0 0
        %1671 = vmatmul.mubr.bf16.gmra.mrb[0].mxu0 %v867
        %v1672 = vpop.f32.mrb[0].mxu0
        %v1673 = vadd.f32 %v1561, %v1672
        %v1674 = vpop.f32.mrb[0].mxu0
        %v1675 = vpop.f32.mrb[0].mxu0
        %v1676 = vadd.f32 %v1561, %v1675
        %v1677 = vpop.f32.mrb[0].mxu0
        %1678 = vmatprep.mubr.bf16.mxu0 0
        %1679 = vmatmul.mubr.bf16.gmra.mrb[0].mxu0 %v870
        %v1680 = vpop.f32.mrb[0].mxu0
        %v1681 = vadd.f32 %v1561, %v1680
        %v1682 = vpop.f32.mrb[0].mxu0
        %v1683 = vpop.f32.mrb[0].mxu0
        %v1684 = vadd.f32 %v1561, %v1683
        %v1685 = vpop.f32.mrb[0].mxu0
        %1686 = vmatprep.mubr.bf16.mxu0 0
        %1687 = vmatmul.mubr.bf16.gmra.mrb[0].mxu0 %v873
        %v1688 = vpop.f32.mrb[0].mxu0
        %v1689 = vadd.f32 %v1561, %v1688
        %v1690 = vpop.f32.mrb[0].mxu0
        %v1691 = vpop.f32.mrb[0].mxu0
        %v1692 = vadd.f32 %v1561, %v1691
        %v1693 = vpop.f32.mrb[0].mxu0
        %1694 = vmatprep.mubr.bf16.mxu0 0
        %1695 = vmatmul.mubr.bf16.gmra.mrb[0].mxu0 %v876
        %v1696 = vpop.f32.mrb[0].mxu0
        %v1697 = vadd.f32 %v1561, %v1696
        %v1698 = vpop.f32.mrb[0].mxu0
        %v1699 = vpop.f32.mrb[0].mxu0
        %v1700 = vadd.f32 %v1561, %v1699
        %v1701 = vpop.f32.mrb[0].mxu0
        %1702 = vmatprep.mubr.bf16.mxu0 0
        %1703 = vmatmul.mubr.bf16.gmra.mrb[0].mxu0 %v879
        %v1704 = vpop.f32.mrb[0].mxu0
        %v1705 = vadd.f32 %v1561, %v1704
        %v1706 = vpop.f32.mrb[0].mxu0
        %v1707 = vpop.f32.mrb[0].mxu0
        %v1708 = vadd.f32 %v1561, %v1707
        %v1709 = vpop.f32.mrb[0].mxu0
        %1710 = vmatprep.mubr.bf16.mxu0 0
        %1711 = vmatmul.mubr.bf16.gmra.mrb[0].mxu0 %v882
        %v1712 = vpop.f32.mrb[0].mxu0
        %v1713 = vadd.f32 %v1561, %v1712
        %v1714 = vpop.f32.mrb[0].mxu0
        %v1715 = vpop.f32.mrb[0].mxu0
        %v1716 = vadd.f32 %v1561, %v1715
        %v1717 = vpop.f32.mrb[0].mxu0
        %1718 = vmatprep.mubr.bf16.mxu0 0
        %1719 = vmatmul.mubr.bf16.gmra.mrb[0].mxu0 %v885
        %v1720 = vpop.f32.mrb[0].mxu0
        %v1721 = vadd.f32 %v1561, %v1720
        %v1722 = vpop.f32.mrb[0].mxu0
        %v1723 = vpop.f32.mrb[0].mxu0
        %v1724 = vadd.f32 %v1561, %v1723
        %v1725 = vpop.f32.mrb[0].mxu0
        %1726 = vmatprep.mubr.bf16.mxu0 0
        %1727 = vmatmul.mubr.bf16.gmra.mrb[0].mxu0 %v888
        %v1728 = vpop.f32.mrb[0].mxu0
        %v1729 = vadd.f32 %v1561, %v1728
        %v1730 = vpop.f32.mrb[0].mxu0
        %v1731 = vpop.f32.mrb[0].mxu0
        %v1732 = vadd.f32 %v1561, %v1731
        %v1733 = vpop.f32.mrb[0].mxu0
        %1734 = vdwg.mxu0
        %v1735 = vpack.c.bf16 %v1612, %v1609
        %v1736 = vpack.c.bf16 %v1620, %v1617
        %v1737 = vpack.c.bf16 %v1628, %v1625
        %v1738 = vpack.c.bf16 %v1636, %v1633
        %v1739 = vpack.c.bf16 %v1644, %v1641
        %v1740 = vpack.c.bf16 %v1652, %v1649
        %v1741 = vpack.c.bf16 %v1660, %v1657
        %v1742 = vpack.c.bf16 %v1668, %v1665
        %v1743 = vpack.c.bf16 %v1676, %v1673
        %v1744 = vpack.c.bf16 %v1684, %v1681
        %v1745 = vpack.c.bf16 %v1692, %v1689
        %v1746 = vpack.c.bf16 %v1700, %v1697
        %v1747 = vpack.c.bf16 %v1708, %v1705
        %v1748 = vpack.c.bf16 %v1716, %v1713
        %v1749 = vpack.c.bf16 %v1724, %v1721
        %v1750 = vpack.c.bf16 %v1732, %v1729
        %v1767 = vunpack.c.l.b16 %v1735
        %v1768 = vunpack.c.h.b16 %v1735
        %v1769 = vunpack.c.l.b16 %v1736
        %v1770 = vunpack.c.h.b16 %v1736
        %v1771 = vunpack.c.l.b16 %v1737
        %v1772 = vunpack.c.h.b16 %v1737
        %v1773 = vunpack.c.l.b16 %v1738
        %v1774 = vunpack.c.h.b16 %v1738
        %v1775 = vunpack.c.l.b16 %v1739
        %v1776 = vunpack.c.h.b16 %v1739
        %v1777 = vunpack.c.l.b16 %v1740
        %v1778 = vunpack.c.h.b16 %v1740
        %v1779 = vunpack.c.l.b16 %v1741
        %v1780 = vunpack.c.h.b16 %v1741
        %v1781 = vunpack.c.l.b16 %v1742
        %v1782 = vunpack.c.h.b16 %v1742
        %v1783 = vunpack.c.l.b16 %v1743
        %v1784 = vunpack.c.h.b16 %v1743
        %v1785 = vunpack.c.l.b16 %v1744
        %v1786 = vunpack.c.h.b16 %v1744
        %v1787 = vunpack.c.l.b16 %v1745
        %v1788 = vunpack.c.h.b16 %v1745
        %v1789 = vunpack.c.l.b16 %v1746
        %v1790 = vunpack.c.h.b16 %v1746
        %v1791 = vunpack.c.l.b16 %v1747
        %v1792 = vunpack.c.h.b16 %v1747
        %v1793 = vunpack.c.l.b16 %v1748
        %v1794 = vunpack.c.h.b16 %v1748
        %v1795 = vunpack.c.l.b16 %v1749
        %v1796 = vunpack.c.h.b16 %v1749
        %v1797 = vunpack.c.l.b16 %v1750
        %v1798 = vunpack.c.h.b16 %v1750
        %v1799 = vpack.c.b16 %v1767, %v1767
        %v1800 = vpack.c.b16 %v1768, %v1768
        %v1801 = vpack.c.b16 %v1769, %v1769
        %v1802 = vpack.c.b16 %v1770, %v1770
        %v1803 = vpack.c.b16 %v1771, %v1771
        %v1804 = vpack.c.b16 %v1772, %v1772
        %v1805 = vpack.c.b16 %v1773, %v1773
        %v1806 = vpack.c.b16 %v1774, %v1774
        %v1807 = vpack.c.b16 %v1775, %v1775
        %v1808 = vpack.c.b16 %v1776, %v1776
        %v1809 = vpack.c.b16 %v1777, %v1777
        %v1810 = vpack.c.b16 %v1778, %v1778
        %v1811 = vpack.c.b16 %v1779, %v1779
        %v1812 = vpack.c.b16 %v1780, %v1780
        %v1813 = vpack.c.b16 %v1781, %v1781
        %v1814 = vpack.c.b16 %v1782, %v1782
        %v1815 = vpack.c.b16 %v1783, %v1783
        %v1816 = vpack.c.b16 %v1784, %v1784
        %v1817 = vpack.c.b16 %v1785, %v1785
        %v1818 = vpack.c.b16 %v1786, %v1786
        %v1819 = vpack.c.b16 %v1787, %v1787
        %v1820 = vpack.c.b16 %v1788, %v1788
        %v1821 = vpack.c.b16 %v1789, %v1789
        %v1822 = vpack.c.b16 %v1790, %v1790
        %v1823 = vpack.c.b16 %v1791, %v1791
        %v1824 = vpack.c.b16 %v1792, %v1792
        %v1825 = vpack.c.b16 %v1793, %v1793
        %v1826 = vpack.c.b16 %v1794, %v1794
        %v1827 = vpack.c.b16 %v1795, %v1795
        %v1828 = vpack.c.b16 %v1796, %v1796
        %v1829 = vpack.c.b16 %v1797, %v1797
        %v1830 = vpack.c.b16 %v1798, %v1798
        %s1863 = scalar_lea.vmem %s268, 256 [#allocation2]
        %1864 = vst.msk [vmem:[%s1863] sm:$0xf] %vm1179, %v1799
        %1865 = vst.msk [vmem:[%s1863 + $0x4] sm:$0xf] %vm1179, %v1800
        %1866 = vst.msk [vmem:[%s1863 + $0x8] sm:$0xf] %vm1179, %v1801
        %1867 = vst.msk [vmem:[%s1863 + $0xc] sm:$0xf] %vm1179, %v1802
        %1868 = vst.msk [vmem:[%s1863 + $0x10] sm:$0xf] %vm1179, %v1803
        %1869 = vst.msk [vmem:[%s1863 + $0x14] sm:$0xf] %vm1179, %v1804
        %1870 = vst.msk [vmem:[%s1863 + $0x18] sm:$0xf] %vm1179, %v1805
        %1871 = vst.msk [vmem:[%s1863 + $0x1c] sm:$0xf] %vm1179, %v1806
        %1872 = vst.msk [vmem:[%s1863 + $0x20] sm:$0xf] %vm1179, %v1807
        %1873 = vst.msk [vmem:[%s1863 + $0x24] sm:$0xf] %vm1179, %v1808
        %1874 = vst.msk [vmem:[%s1863 + $0x28] sm:$0xf] %vm1179, %v1809
        %1875 = vst.msk [vmem:[%s1863 + $0x2c] sm:$0xf] %vm1179, %v1810
        %1876 = vst.msk [vmem:[%s1863 + $0x30] sm:$0xf] %vm1179, %v1811
        %1877 = vst.msk [vmem:[%s1863 + $0x34] sm:$0xf] %vm1179, %v1812
        %1878 = vst.msk [vmem:[%s1863 + $0x38] sm:$0xf] %vm1179, %v1813
        %1879 = vst.msk [vmem:[%s1863 + $0x3c] sm:$0xf] %vm1179, %v1814
        %1880 = vst.msk [vmem:[%s1863 + $0x40] sm:$0xf] %vm1179, %v1815
        %1881 = vst.msk [vmem:[%s1863 + $0x44] sm:$0xf] %vm1179, %v1816
        %1882 = vst.msk [vmem:[%s1863 + $0x48] sm:$0xf] %vm1179, %v1817
        %1883 = vst.msk [vmem:[%s1863 + $0x4c] sm:$0xf] %vm1179, %v1818
        %1884 = vst.msk [vmem:[%s1863 + $0x50] sm:$0xf] %vm1179, %v1819
        %1885 = vst.msk [vmem:[%s1863 + $0x54] sm:$0xf] %vm1179, %v1820
        %1886 = vst.msk [vmem:[%s1863 + $0x58] sm:$0xf] %vm1179, %v1821
        %1887 = vst.msk [vmem:[%s1863 + $0x5c] sm:$0xf] %vm1179, %v1822
        %1888 = vst.msk [vmem:[%s1863 + $0x60] sm:$0xf] %vm1179, %v1823
        %1889 = vst.msk [vmem:[%s1863 + $0x64] sm:$0xf] %vm1179, %v1824
        %1890 = vst.msk [vmem:[%s1863 + $0x68] sm:$0xf] %vm1179, %v1825
        %1891 = vst.msk [vmem:[%s1863 + $0x6c] sm:$0xf] %vm1179, %v1826
        %1892 = vst.msk [vmem:[%s1863 + $0x70] sm:$0xf] %vm1179, %v1827
        %1893 = vst.msk [vmem:[%s1863 + $0x74] sm:$0xf] %vm1179, %v1828
        %1894 = vst.msk [vmem:[%s1863 + $0x78] sm:$0xf] %vm1179, %v1829
        %1895 = vst.msk [vmem:[%s1863 + $0x7c] sm:$0xf] %vm1179, %v1830
        %s1896 = sand.u32 %s178, 1
        %s1897 = sand.u32 %s178, 1
        %s1898 = smul.addr %s1897, 384
        %s1899 = scalar_lea.vmem [#allocation2], %s1898
        // Predicated region
        $region49: #{tpu_custom_call.1} parent=47 // pred_check
          %p1900 = pneg %p188
        $region50: #{tpu_custom_call.1} parent=47 // pred_check_branch
          %1902 = sbr.rel (%p1900) target = $region52
        $region51: #{tpu_custom_call.1} parent=47 // pred_region
          %s1903 = smul.u32 32, %s18
          %s1904 = smul.addr %s1903, 4
          %s1905 = scalar_lea.vmem %s7, %s1904
          // Predicated region
          $region53: #{tpu_custom_call.1} parent=51 // pred_check
            _
          $region54: #{tpu_custom_call.1} parent=51 // pred_check_branch
            %1907 = sbr.rel (0) target = $region56
          $region55: #{tpu_custom_call.1} parent=51 // pred_region
            // Predicated region
            $region57: #{tpu_custom_call.1} parent=55 // pred_check
              _
            $region58: #{tpu_custom_call.1} parent=55 // pred_check_branch
              %1909 = sbr.rel target = $region60
            $region59: #{tpu_custom_call.1} parent=55 // pred_region
              // Predicated region
              $region72: #{tpu_custom_call.1} parent=59 // pred_check
                _
              $region73: #{tpu_custom_call.1} parent=59 // pred_check_branch
                %2114 = sbr.rel (0) target = $region75
              $region74: #{tpu_custom_call.1} parent=59 // pred_region
                loop: start=0, step=1, limit=1
                $region76: #{tpu_custom_call.1} parent=74 // loop_pre_header
                  _
                $region77: #{tpu_custom_call.1} parent=74 // loop_header
                  %s2116 = sphi 0, %s2120
                  %p2117 = scmp.ge.s32.totalorder %s2116, 1
                  %s2121 = sphi %s1899, %s1899
                  %s2122 = sphi %s1905, %s1905
                $region78: #{tpu_custom_call.1} parent=74 // loop_header_branch
                  %2119 = sbr.rel (%p2117) target = $region82
                $region79: #{tpu_custom_call.1} parent=74 // loop_body
                  _
                $region80: #{tpu_custom_call.1} parent=74 // loop_footer
                  %s2120 = sadd.s32 1, %s2116
                $region81: #{tpu_custom_call.1} parent=74 // loop_footer_branch
                  %2115 = sbr.rel target = $region77
                $region82: #{tpu_custom_call.1} parent=74 // loop_exit
                  _
                loop: start=0, step=1, limit=1
                $region83: #{tpu_custom_call.1} parent=74 // loop_pre_header
                  _
                $region84: #{tpu_custom_call.1} parent=74 // loop_header
                  %s2125 = sphi 0, %s2129
                  %p2126 = scmp.ge.s32.totalorder %s2125, 1
                  %s2130 = sphi %s1899, %s1899
                  %s2131 = sphi %s1905, %s1905
                $region85: #{tpu_custom_call.1} parent=74 // loop_header_branch
                  %2128 = sbr.rel (%p2126) target = $region89
                $region86: #{tpu_custom_call.1} parent=74 // loop_body
                  %v2132 = vld [vmem:[%s2130] sm:$0xf]
                  %2133 = vst [vmem:[%s2131] sm:$0xf] %v2132
                  %v2134 = vld [vmem:[%s2130 + $0x4] sm:$0xf]
                  %2135 = vst [vmem:[%s2131 + $0x4] sm:$0xf] %v2134
                  %v2136 = vld [vmem:[%s2130 + $0x8] sm:$0xf]
                  %2137 = vst [vmem:[%s2131 + $0x8] sm:$0xf] %v2136
                  %v2138 = vld [vmem:[%s2130 + $0xc] sm:$0xf]
                  %2139 = vst [vmem:[%s2131 + $0xc] sm:$0xf] %v2138
                  %v2140 = vld [vmem:[%s2130 + $0x10] sm:$0xf]
                  %2141 = vst [vmem:[%s2131 + $0x10] sm:$0xf] %v2140
                  %v2142 = vld [vmem:[%s2130 + $0x14] sm:$0xf]
                  %2143 = vst [vmem:[%s2131 + $0x14] sm:$0xf] %v2142
                  %v2144 = vld [vmem:[%s2130 + $0x18] sm:$0xf]
                  %2145 = vst [vmem:[%s2131 + $0x18] sm:$0xf] %v2144
                  %v2146 = vld [vmem:[%s2130 + $0x1c] sm:$0xf]
                  %2147 = vst [vmem:[%s2131 + $0x1c] sm:$0xf] %v2146
                  %v2148 = vld [vmem:[%s2130 + $0x20] sm:$0xf]
                  %2149 = vst [vmem:[%s2131 + $0x20] sm:$0xf] %v2148
                  %v2150 = vld [vmem:[%s2130 + $0x24] sm:$0xf]
                  %2151 = vst [vmem:[%s2131 + $0x24] sm:$0xf] %v2150
                  %v2152 = vld [vmem:[%s2130 + $0x28] sm:$0xf]
                  %2153 = vst [vmem:[%s2131 + $0x28] sm:$0xf] %v2152
                  %v2154 = vld [vmem:[%s2130 + $0x2c] sm:$0xf]
                  %2155 = vst [vmem:[%s2131 + $0x2c] sm:$0xf] %v2154
                  %v2156 = vld [vmem:[%s2130 + $0x30] sm:$0xf]
                  %2157 = vst [vmem:[%s2131 + $0x30] sm:$0xf] %v2156
                  %v2158 = vld [vmem:[%s2130 + $0x34] sm:$0xf]
                  %2159 = vst [vmem:[%s2131 + $0x34] sm:$0xf] %v2158
                  %v2160 = vld [vmem:[%s2130 + $0x38] sm:$0xf]
                  %2161 = vst [vmem:[%s2131 + $0x38] sm:$0xf] %v2160
                  %v2162 = vld [vmem:[%s2130 + $0x3c] sm:$0xf]
                  %2163 = vst [vmem:[%s2131 + $0x3c] sm:$0xf] %v2162
                  %v2164 = vld [vmem:[%s2130 + $0x40] sm:$0xf]
                  %2165 = vst [vmem:[%s2131 + $0x40] sm:$0xf] %v2164
                  %v2166 = vld [vmem:[%s2130 + $0x44] sm:$0xf]
                  %2167 = vst [vmem:[%s2131 + $0x44] sm:$0xf] %v2166
                  %v2168 = vld [vmem:[%s2130 + $0x48] sm:$0xf]
                  %2169 = vst [vmem:[%s2131 + $0x48] sm:$0xf] %v2168
                  %v2170 = vld [vmem:[%s2130 + $0x4c] sm:$0xf]
                  %2171 = vst [vmem:[%s2131 + $0x4c] sm:$0xf] %v2170
                  %v2172 = vld [vmem:[%s2130 + $0x50] sm:$0xf]
                  %2173 = vst [vmem:[%s2131 + $0x50] sm:$0xf] %v2172
                  %v2174 = vld [vmem:[%s2130 + $0x54] sm:$0xf]
                  %2175 = vst [vmem:[%s2131 + $0x54] sm:$0xf] %v2174
                  %v2176 = vld [vmem:[%s2130 + $0x58] sm:$0xf]
                  %2177 = vst [vmem:[%s2131 + $0x58] sm:$0xf] %v2176
                  %v2178 = vld [vmem:[%s2130 + $0x5c] sm:$0xf]
                  %2179 = vst [vmem:[%s2131 + $0x5c] sm:$0xf] %v2178
                  %v2180 = vld [vmem:[%s2130 + $0x60] sm:$0xf]
                  %2181 = vst [vmem:[%s2131 + $0x60] sm:$0xf] %v2180
                  %v2182 = vld [vmem:[%s2130 + $0x64] sm:$0xf]
                  %2183 = vst [vmem:[%s2131 + $0x64] sm:$0xf] %v2182
                  %v2184 = vld [vmem:[%s2130 + $0x68] sm:$0xf]
                  %2185 = vst [vmem:[%s2131 + $0x68] sm:$0xf] %v2184
                  %v2186 = vld [vmem:[%s2130 + $0x6c] sm:$0xf]
                  %2187 = vst [vmem:[%s2131 + $0x6c] sm:$0xf] %v2186
                  %v2188 = vld [vmem:[%s2130 + $0x70] sm:$0xf]
                  %2189 = vst [vmem:[%s2131 + $0x70] sm:$0xf] %v2188
                  %v2190 = vld [vmem:[%s2130 + $0x74] sm:$0xf]
                  %2191 = vst [vmem:[%s2131 + $0x74] sm:$0xf] %v2190
                  %v2192 = vld [vmem:[%s2130 + $0x78] sm:$0xf]
                  %2193 = vst [vmem:[%s2131 + $0x78] sm:$0xf] %v2192
                  %v2194 = vld [vmem:[%s2130 + $0x7c] sm:$0xf]
                  %2195 = vst [vmem:[%s2131 + $0x7c] sm:$0xf] %v2194
                  %v2196 = vld [vmem:[%s2130 + $0x80] sm:$0xf]
                  %2197 = vst [vmem:[%s2131 + $0x100] sm:$0xf] %v2196
                  %v2198 = vld [vmem:[%s2130 + $0x84] sm:$0xf]
                  %2199 = vst [vmem:[%s2131 + $0x104] sm:$0xf] %v2198
                  %v2200 = vld [vmem:[%s2130 + $0x88] sm:$0xf]
                  %2201 = vst [vmem:[%s2131 + $0x108] sm:$0xf] %v2200
                  %v2202 = vld [vmem:[%s2130 + $0x8c] sm:$0xf]
                  %2203 = vst [vmem:[%s2131 + $0x10c] sm:$0xf] %v2202
                  %v2204 = vld [vmem:[%s2130 + $0x90] sm:$0xf]
                  %2205 = vst [vmem:[%s2131 + $0x110] sm:$0xf] %v2204
                  %v2206 = vld [vmem:[%s2130 + $0x94] sm:$0xf]
                  %2207 = vst [vmem:[%s2131 + $0x114] sm:$0xf] %v2206
                  %v2208 = vld [vmem:[%s2130 + $0x98] sm:$0xf]
                  %2209 = vst [vmem:[%s2131 + $0x118] sm:$0xf] %v2208
                  %v2210 = vld [vmem:[%s2130 + $0x9c] sm:$0xf]
                  %2211 = vst [vmem:[%s2131 + $0x11c] sm:$0xf] %v2210
                  %v2212 = vld [vmem:[%s2130 + $0xa0] sm:$0xf]
                  %2213 = vst [vmem:[%s2131 + $0x120] sm:$0xf] %v2212
                  %v2214 = vld [vmem:[%s2130 + $0xa4] sm:$0xf]
                  %2215 = vst [vmem:[%s2131 + $0x124] sm:$0xf] %v2214
                  %v2216 = vld [vmem:[%s2130 + $0xa8] sm:$0xf]
                  %2217 = vst [vmem:[%s2131 + $0x128] sm:$0xf] %v2216
                  %v2218 = vld [vmem:[%s2130 + $0xac] sm:$0xf]
                  %2219 = vst [vmem:[%s2131 + $0x12c] sm:$0xf] %v2218
                  %v2220 = vld [vmem:[%s2130 + $0xb0] sm:$0xf]
                  %2221 = vst [vmem:[%s2131 + $0x130] sm:$0xf] %v2220
                  %v2222 = vld [vmem:[%s2130 + $0xb4] sm:$0xf]
                  %2223 = vst [vmem:[%s2131 + $0x134] sm:$0xf] %v2222
                  %v2224 = vld [vmem:[%s2130 + $0xb8] sm:$0xf]
                  %2225 = vst [vmem:[%s2131 + $0x138] sm:$0xf] %v2224
                  %v2226 = vld [vmem:[%s2130 + $0xbc] sm:$0xf]
                  %2227 = vst [vmem:[%s2131 + $0x13c] sm:$0xf] %v2226
                  %v2228 = vld [vmem:[%s2130 + $0xc0] sm:$0xf]
                  %2229 = vst [vmem:[%s2131 + $0x140] sm:$0xf] %v2228
                  %v2230 = vld [vmem:[%s2130 + $0xc4] sm:$0xf]
                  %2231 = vst [vmem:[%s2131 + $0x144] sm:$0xf] %v2230
                  %v2232 = vld [vmem:[%s2130 + $0xc8] sm:$0xf]
                  %2233 = vst [vmem:[%s2131 + $0x148] sm:$0xf] %v2232
                  %v2234 = vld [vmem:[%s2130 + $0xcc] sm:$0xf]
                  %2235 = vst [vmem:[%s2131 + $0x14c] sm:$0xf] %v2234
                  %v2236 = vld [vmem:[%s2130 + $0xd0] sm:$0xf]
                  %2237 = vst [vmem:[%s2131 + $0x150] sm:$0xf] %v2236
                  %v2238 = vld [vmem:[%s2130 + $0xd4] sm:$0xf]
                  %2239 = vst [vmem:[%s2131 + $0x154] sm:$0xf] %v2238
                  %v2240 = vld [vmem:[%s2130 + $0xd8] sm:$0xf]
                  %2241 = vst [vmem:[%s2131 + $0x158] sm:$0xf] %v2240
                  %v2242 = vld [vmem:[%s2130 + $0xdc] sm:$0xf]
                  %2243 = vst [vmem:[%s2131 + $0x15c] sm:$0xf] %v2242
                  %v2244 = vld [vmem:[%s2130 + $0xe0] sm:$0xf]
                  %2245 = vst [vmem:[%s2131 + $0x160] sm:$0xf] %v2244
                  %v2246 = vld [vmem:[%s2130 + $0xe4] sm:$0xf]
                  %2247 = vst [vmem:[%s2131 + $0x164] sm:$0xf] %v2246
                  %v2248 = vld [vmem:[%s2130 + $0xe8] sm:$0xf]
                  %2249 = vst [vmem:[%s2131 + $0x168] sm:$0xf] %v2248
                  %v2250 = vld [vmem:[%s2130 + $0xec] sm:$0xf]
                  %2251 = vst [vmem:[%s2131 + $0x16c] sm:$0xf] %v2250
                  %v2252 = vld [vmem:[%s2130 + $0xf0] sm:$0xf]
                  %2253 = vst [vmem:[%s2131 + $0x170] sm:$0xf] %v2252
                  %v2254 = vld [vmem:[%s2130 + $0xf4] sm:$0xf]
                  %2255 = vst [vmem:[%s2131 + $0x174] sm:$0xf] %v2254
                  %v2256 = vld [vmem:[%s2130 + $0xf8] sm:$0xf]
                  %2257 = vst [vmem:[%s2131 + $0x178] sm:$0xf] %v2256
                  %v2258 = vld [vmem:[%s2130 + $0xfc] sm:$0xf]
                  %2259 = vst [vmem:[%s2131 + $0x17c] sm:$0xf] %v2258
                  %v2260 = vld [vmem:[%s2130 + $0x100] sm:$0xf]
                  %2261 = vst [vmem:[%s2131 + $0x200] sm:$0xf] %v2260
                  %v2262 = vld [vmem:[%s2130 + $0x104] sm:$0xf]
                  %2263 = vst [vmem:[%s2131 + $0x204] sm:$0xf] %v2262
                  %v2264 = vld [vmem:[%s2130 + $0x108] sm:$0xf]
                  %2265 = vst [vmem:[%s2131 + $0x208] sm:$0xf] %v2264
                  %v2266 = vld [vmem:[%s2130 + $0x10c] sm:$0xf]
                  %2267 = vst [vmem:[%s2131 + $0x20c] sm:$0xf] %v2266
                  %v2268 = vld [vmem:[%s2130 + $0x110] sm:$0xf]
                  %2269 = vst [vmem:[%s2131 + $0x210] sm:$0xf] %v2268
                  %v2270 = vld [vmem:[%s2130 + $0x114] sm:$0xf]
                  %2271 = vst [vmem:[%s2131 + $0x214] sm:$0xf] %v2270
                  %v2272 = vld [vmem:[%s2130 + $0x118] sm:$0xf]
                  %2273 = vst [vmem:[%s2131 + $0x218] sm:$0xf] %v2272
                  %v2274 = vld [vmem:[%s2130 + $0x11c] sm:$0xf]
                  %2275 = vst [vmem:[%s2131 + $0x21c] sm:$0xf] %v2274
                  %v2276 = vld [vmem:[%s2130 + $0x120] sm:$0xf]
                  %2277 = vst [vmem:[%s2131 + $0x220] sm:$0xf] %v2276
                  %v2278 = vld [vmem:[%s2130 + $0x124] sm:$0xf]
                  %2279 = vst [vmem:[%s2131 + $0x224] sm:$0xf] %v2278
                  %v2280 = vld [vmem:[%s2130 + $0x128] sm:$0xf]
                  %2281 = vst [vmem:[%s2131 + $0x228] sm:$0xf] %v2280
                  %v2282 = vld [vmem:[%s2130 + $0x12c] sm:$0xf]
                  %2283 = vst [vmem:[%s2131 + $0x22c] sm:$0xf] %v2282
                  %v2284 = vld [vmem:[%s2130 + $0x130] sm:$0xf]
                  %2285 = vst [vmem:[%s2131 + $0x230] sm:$0xf] %v2284
                  %v2286 = vld [vmem:[%s2130 + $0x134] sm:$0xf]
                  %2287 = vst [vmem:[%s2131 + $0x234] sm:$0xf] %v2286
                  %v2288 = vld [vmem:[%s2130 + $0x138] sm:$0xf]
                  %2289 = vst [vmem:[%s2131 + $0x238] sm:$0xf] %v2288
                  %v2290 = vld [vmem:[%s2130 + $0x13c] sm:$0xf]
                  %2291 = vst [vmem:[%s2131 + $0x23c] sm:$0xf] %v2290
                  %v2292 = vld [vmem:[%s2130 + $0x140] sm:$0xf]
                  %2293 = vst [vmem:[%s2131 + $0x240] sm:$0xf] %v2292
                  %v2294 = vld [vmem:[%s2130 + $0x144] sm:$0xf]
                  %2295 = vst [vmem:[%s2131 + $0x244] sm:$0xf] %v2294
                  %v2296 = vld [vmem:[%s2130 + $0x148] sm:$0xf]
                  %2297 = vst [vmem:[%s2131 + $0x248] sm:$0xf] %v2296
                  %v2298 = vld [vmem:[%s2130 + $0x14c] sm:$0xf]
                  %2299 = vst [vmem:[%s2131 + $0x24c] sm:$0xf] %v2298
                  %v2300 = vld [vmem:[%s2130 + $0x150] sm:$0xf]
                  %2301 = vst [vmem:[%s2131 + $0x250] sm:$0xf] %v2300
                  %v2302 = vld [vmem:[%s2130 + $0x154] sm:$0xf]
                  %2303 = vst [vmem:[%s2131 + $0x254] sm:$0xf] %v2302
                  %v2304 = vld [vmem:[%s2130 + $0x158] sm:$0xf]
                  %2305 = vst [vmem:[%s2131 + $0x258] sm:$0xf] %v2304
                  %v2306 = vld [vmem:[%s2130 + $0x15c] sm:$0xf]
                  %2307 = vst [vmem:[%s2131 + $0x25c] sm:$0xf] %v2306
                  %v2308 = vld [vmem:[%s2130 + $0x160] sm:$0xf]
                  %2309 = vst [vmem:[%s2131 + $0x260] sm:$0xf] %v2308
                  %v2310 = vld [vmem:[%s2130 + $0x164] sm:$0xf]
                  %2311 = vst [vmem:[%s2131 + $0x264] sm:$0xf] %v2310
                  %v2312 = vld [vmem:[%s2130 + $0x168] sm:$0xf]
                  %2313 = vst [vmem:[%s2131 + $0x268] sm:$0xf] %v2312
                  %v2314 = vld [vmem:[%s2130 + $0x16c] sm:$0xf]
                  %2315 = vst [vmem:[%s2131 + $0x26c] sm:$0xf] %v2314
                  %v2316 = vld [vmem:[%s2130 + $0x170] sm:$0xf]
                  %2317 = vst [vmem:[%s2131 + $0x270] sm:$0xf] %v2316
                  %v2318 = vld [vmem:[%s2130 + $0x174] sm:$0xf]
                  %2319 = vst [vmem:[%s2131 + $0x274] sm:$0xf] %v2318
                  %v2320 = vld [vmem:[%s2130 + $0x178] sm:$0xf]
                  %2321 = vst [vmem:[%s2131 + $0x278] sm:$0xf] %v2320
                  %v2322 = vld [vmem:[%s2130 + $0x17c] sm:$0xf]
                  %2323 = vst [vmem:[%s2131 + $0x27c] sm:$0xf] %v2322
                $region87: #{tpu_custom_call.1} parent=74 // loop_footer
                  %s2129 = sadd.s32 1, %s2125
                $region88: #{tpu_custom_call.1} parent=74 // loop_footer_branch
                  %2124 = sbr.rel target = $region84
                $region89: #{tpu_custom_call.1} parent=74 // loop_exit
                  _
              $region75: #{tpu_custom_call.1} parent=59 // pred_fallthru
                _
            $region60: #{tpu_custom_call.1} parent=55 // pred_fallthru
              _
            // Predicated region
            $region61: #{tpu_custom_call.1} parent=55 // pred_check
              _
            $region62: #{tpu_custom_call.1} parent=55 // pred_check_branch
              %1911 = sbr.rel (0) target = $region64
            $region63: #{tpu_custom_call.1} parent=55 // pred_region
              loop: start=0, step=1, limit=1
              $region65: #{tpu_custom_call.1} parent=63 // loop_pre_header
                _
              $region66: #{tpu_custom_call.1} parent=63 // loop_header
                %s1914 = sphi 0, %s1918
                %p1915 = scmp.ge.s32.totalorder %s1914, 1
                %s1919 = sphi %s1899, %s1899
                %s1920 = sphi %s1905, %s1905
              $region67: #{tpu_custom_call.1} parent=63 // loop_header_branch
                %1917 = sbr.rel (%p1915) target = $region71
              $region68: #{tpu_custom_call.1} parent=63 // loop_body
                %v1921 = vld [vmem:[%s1919] sm:$0xf]
                %1922 = vst [vmem:[%s1920] sm:$0xf] %v1921
                %v1923 = vld [vmem:[%s1919 + $0x4] sm:$0xf]
                %1924 = vst [vmem:[%s1920 + $0x4] sm:$0xf] %v1923
                %v1925 = vld [vmem:[%s1919 + $0x8] sm:$0xf]
                %1926 = vst [vmem:[%s1920 + $0x8] sm:$0xf] %v1925
                %v1927 = vld [vmem:[%s1919 + $0xc] sm:$0xf]
                %1928 = vst [vmem:[%s1920 + $0xc] sm:$0xf] %v1927
                %v1929 = vld [vmem:[%s1919 + $0x10] sm:$0xf]
                %1930 = vst [vmem:[%s1920 + $0x10] sm:$0xf] %v1929
                %v1931 = vld [vmem:[%s1919 + $0x14] sm:$0xf]
                %1932 = vst [vmem:[%s1920 + $0x14] sm:$0xf] %v1931
                %v1933 = vld [vmem:[%s1919 + $0x18] sm:$0xf]
                %1934 = vst [vmem:[%s1920 + $0x18] sm:$0xf] %v1933
                %v1935 = vld [vmem:[%s1919 + $0x1c] sm:$0xf]
                %1936 = vst [vmem:[%s1920 + $0x1c] sm:$0xf] %v1935
                %v1937 = vld [vmem:[%s1919 + $0x20] sm:$0xf]
                %1938 = vst [vmem:[%s1920 + $0x20] sm:$0xf] %v1937
                %v1939 = vld [vmem:[%s1919 + $0x24] sm:$0xf]
                %1940 = vst [vmem:[%s1920 + $0x24] sm:$0xf] %v1939
                %v1941 = vld [vmem:[%s1919 + $0x28] sm:$0xf]
                %1942 = vst [vmem:[%s1920 + $0x28] sm:$0xf] %v1941
                %v1943 = vld [vmem:[%s1919 + $0x2c] sm:$0xf]
                %1944 = vst [vmem:[%s1920 + $0x2c] sm:$0xf] %v1943
                %v1945 = vld [vmem:[%s1919 + $0x30] sm:$0xf]
                %1946 = vst [vmem:[%s1920 + $0x30] sm:$0xf] %v1945
                %v1947 = vld [vmem:[%s1919 + $0x34] sm:$0xf]
                %1948 = vst [vmem:[%s1920 + $0x34] sm:$0xf] %v1947
                %v1949 = vld [vmem:[%s1919 + $0x38] sm:$0xf]
                %1950 = vst [vmem:[%s1920 + $0x38] sm:$0xf] %v1949
                %v1951 = vld [vmem:[%s1919 + $0x3c] sm:$0xf]
                %1952 = vst [vmem:[%s1920 + $0x3c] sm:$0xf] %v1951
                %v1953 = vld [vmem:[%s1919 + $0x40] sm:$0xf]
                %1954 = vst [vmem:[%s1920 + $0x40] sm:$0xf] %v1953
                %v1955 = vld [vmem:[%s1919 + $0x44] sm:$0xf]
                %1956 = vst [vmem:[%s1920 + $0x44] sm:$0xf] %v1955
                %v1957 = vld [vmem:[%s1919 + $0x48] sm:$0xf]
                %1958 = vst [vmem:[%s1920 + $0x48] sm:$0xf] %v1957
                %v1959 = vld [vmem:[%s1919 + $0x4c] sm:$0xf]
                %1960 = vst [vmem:[%s1920 + $0x4c] sm:$0xf] %v1959
                %v1961 = vld [vmem:[%s1919 + $0x50] sm:$0xf]
                %1962 = vst [vmem:[%s1920 + $0x50] sm:$0xf] %v1961
                %v1963 = vld [vmem:[%s1919 + $0x54] sm:$0xf]
                %1964 = vst [vmem:[%s1920 + $0x54] sm:$0xf] %v1963
                %v1965 = vld [vmem:[%s1919 + $0x58] sm:$0xf]
                %1966 = vst [vmem:[%s1920 + $0x58] sm:$0xf] %v1965
                %v1967 = vld [vmem:[%s1919 + $0x5c] sm:$0xf]
                %1968 = vst [vmem:[%s1920 + $0x5c] sm:$0xf] %v1967
                %v1969 = vld [vmem:[%s1919 + $0x60] sm:$0xf]
                %1970 = vst [vmem:[%s1920 + $0x60] sm:$0xf] %v1969
                %v1971 = vld [vmem:[%s1919 + $0x64] sm:$0xf]
                %1972 = vst [vmem:[%s1920 + $0x64] sm:$0xf] %v1971
                %v1973 = vld [vmem:[%s1919 + $0x68] sm:$0xf]
                %1974 = vst [vmem:[%s1920 + $0x68] sm:$0xf] %v1973
                %v1975 = vld [vmem:[%s1919 + $0x6c] sm:$0xf]
                %1976 = vst [vmem:[%s1920 + $0x6c] sm:$0xf] %v1975
                %v1977 = vld [vmem:[%s1919 + $0x70] sm:$0xf]
                %1978 = vst [vmem:[%s1920 + $0x70] sm:$0xf] %v1977
                %v1979 = vld [vmem:[%s1919 + $0x74] sm:$0xf]
                %1980 = vst [vmem:[%s1920 + $0x74] sm:$0xf] %v1979
                %v1981 = vld [vmem:[%s1919 + $0x78] sm:$0xf]
                %1982 = vst [vmem:[%s1920 + $0x78] sm:$0xf] %v1981
                %v1983 = vld [vmem:[%s1919 + $0x7c] sm:$0xf]
                %1984 = vst [vmem:[%s1920 + $0x7c] sm:$0xf] %v1983
                %v1985 = vld [vmem:[%s1919 + $0x80] sm:$0xf]
                %1986 = vst [vmem:[%s1920 + $0x100] sm:$0xf] %v1985
                %v1987 = vld [vmem:[%s1919 + $0x84] sm:$0xf]
                %1988 = vst [vmem:[%s1920 + $0x104] sm:$0xf] %v1987
                %v1989 = vld [vmem:[%s1919 + $0x88] sm:$0xf]
                %1990 = vst [vmem:[%s1920 + $0x108] sm:$0xf] %v1989
                %v1991 = vld [vmem:[%s1919 + $0x8c] sm:$0xf]
                %1992 = vst [vmem:[%s1920 + $0x10c] sm:$0xf] %v1991
                %v1993 = vld [vmem:[%s1919 + $0x90] sm:$0xf]
                %1994 = vst [vmem:[%s1920 + $0x110] sm:$0xf] %v1993
                %v1995 = vld [vmem:[%s1919 + $0x94] sm:$0xf]
                %1996 = vst [vmem:[%s1920 + $0x114] sm:$0xf] %v1995
                %v1997 = vld [vmem:[%s1919 + $0x98] sm:$0xf]
                %1998 = vst [vmem:[%s1920 + $0x118] sm:$0xf] %v1997
                %v1999 = vld [vmem:[%s1919 + $0x9c] sm:$0xf]
                %2000 = vst [vmem:[%s1920 + $0x11c] sm:$0xf] %v1999
                %v2001 = vld [vmem:[%s1919 + $0xa0] sm:$0xf]
                %2002 = vst [vmem:[%s1920 + $0x120] sm:$0xf] %v2001
                %v2003 = vld [vmem:[%s1919 + $0xa4] sm:$0xf]
                %2004 = vst [vmem:[%s1920 + $0x124] sm:$0xf] %v2003
                %v2005 = vld [vmem:[%s1919 + $0xa8] sm:$0xf]
                %2006 = vst [vmem:[%s1920 + $0x128] sm:$0xf] %v2005
                %v2007 = vld [vmem:[%s1919 + $0xac] sm:$0xf]
                %2008 = vst [vmem:[%s1920 + $0x12c] sm:$0xf] %v2007
                %v2009 = vld [vmem:[%s1919 + $0xb0] sm:$0xf]
                %2010 = vst [vmem:[%s1920 + $0x130] sm:$0xf] %v2009
                %v2011 = vld [vmem:[%s1919 + $0xb4] sm:$0xf]
                %2012 = vst [vmem:[%s1920 + $0x134] sm:$0xf] %v2011
                %v2013 = vld [vmem:[%s1919 + $0xb8] sm:$0xf]
                %2014 = vst [vmem:[%s1920 + $0x138] sm:$0xf] %v2013
                %v2015 = vld [vmem:[%s1919 + $0xbc] sm:$0xf]
                %2016 = vst [vmem:[%s1920 + $0x13c] sm:$0xf] %v2015
                %v2017 = vld [vmem:[%s1919 + $0xc0] sm:$0xf]
                %2018 = vst [vmem:[%s1920 + $0x140] sm:$0xf] %v2017
                %v2019 = vld [vmem:[%s1919 + $0xc4] sm:$0xf]
                %2020 = vst [vmem:[%s1920 + $0x144] sm:$0xf] %v2019
                %v2021 = vld [vmem:[%s1919 + $0xc8] sm:$0xf]
                %2022 = vst [vmem:[%s1920 + $0x148] sm:$0xf] %v2021
                %v2023 = vld [vmem:[%s1919 + $0xcc] sm:$0xf]
                %2024 = vst [vmem:[%s1920 + $0x14c] sm:$0xf] %v2023
                %v2025 = vld [vmem:[%s1919 + $0xd0] sm:$0xf]
                %2026 = vst [vmem:[%s1920 + $0x150] sm:$0xf] %v2025
                %v2027 = vld [vmem:[%s1919 + $0xd4] sm:$0xf]
                %2028 = vst [vmem:[%s1920 + $0x154] sm:$0xf] %v2027
                %v2029 = vld [vmem:[%s1919 + $0xd8] sm:$0xf]
                %2030 = vst [vmem:[%s1920 + $0x158] sm:$0xf] %v2029
                %v2031 = vld [vmem:[%s1919 + $0xdc] sm:$0xf]
                %2032 = vst [vmem:[%s1920 + $0x15c] sm:$0xf] %v2031
                %v2033 = vld [vmem:[%s1919 + $0xe0] sm:$0xf]
                %2034 = vst [vmem:[%s1920 + $0x160] sm:$0xf] %v2033
                %v2035 = vld [vmem:[%s1919 + $0xe4] sm:$0xf]
                %2036 = vst [vmem:[%s1920 + $0x164] sm:$0xf] %v2035
                %v2037 = vld [vmem:[%s1919 + $0xe8] sm:$0xf]
                %2038 = vst [vmem:[%s1920 + $0x168] sm:$0xf] %v2037
                %v2039 = vld [vmem:[%s1919 + $0xec] sm:$0xf]
                %2040 = vst [vmem:[%s1920 + $0x16c] sm:$0xf] %v2039
                %v2041 = vld [vmem:[%s1919 + $0xf0] sm:$0xf]
                %2042 = vst [vmem:[%s1920 + $0x170] sm:$0xf] %v2041
                %v2043 = vld [vmem:[%s1919 + $0xf4] sm:$0xf]
                %2044 = vst [vmem:[%s1920 + $0x174] sm:$0xf] %v2043
                %v2045 = vld [vmem:[%s1919 + $0xf8] sm:$0xf]
                %2046 = vst [vmem:[%s1920 + $0x178] sm:$0xf] %v2045
                %v2047 = vld [vmem:[%s1919 + $0xfc] sm:$0xf]
                %2048 = vst [vmem:[%s1920 + $0x17c] sm:$0xf] %v2047
                %v2049 = vld [vmem:[%s1919 + $0x100] sm:$0xf]
                %2050 = vst [vmem:[%s1920 + $0x200] sm:$0xf] %v2049
                %v2051 = vld [vmem:[%s1919 + $0x104] sm:$0xf]
                %2052 = vst [vmem:[%s1920 + $0x204] sm:$0xf] %v2051
                %v2053 = vld [vmem:[%s1919 + $0x108] sm:$0xf]
                %2054 = vst [vmem:[%s1920 + $0x208] sm:$0xf] %v2053
                %v2055 = vld [vmem:[%s1919 + $0x10c] sm:$0xf]
                %2056 = vst [vmem:[%s1920 + $0x20c] sm:$0xf] %v2055
                %v2057 = vld [vmem:[%s1919 + $0x110] sm:$0xf]
                %2058 = vst [vmem:[%s1920 + $0x210] sm:$0xf] %v2057
                %v2059 = vld [vmem:[%s1919 + $0x114] sm:$0xf]
                %2060 = vst [vmem:[%s1920 + $0x214] sm:$0xf] %v2059
                %v2061 = vld [vmem:[%s1919 + $0x118] sm:$0xf]
                %2062 = vst [vmem:[%s1920 + $0x218] sm:$0xf] %v2061
                %v2063 = vld [vmem:[%s1919 + $0x11c] sm:$0xf]
                %2064 = vst [vmem:[%s1920 + $0x21c] sm:$0xf] %v2063
                %v2065 = vld [vmem:[%s1919 + $0x120] sm:$0xf]
                %2066 = vst [vmem:[%s1920 + $0x220] sm:$0xf] %v2065
                %v2067 = vld [vmem:[%s1919 + $0x124] sm:$0xf]
                %2068 = vst [vmem:[%s1920 + $0x224] sm:$0xf] %v2067
                %v2069 = vld [vmem:[%s1919 + $0x128] sm:$0xf]
                %2070 = vst [vmem:[%s1920 + $0x228] sm:$0xf] %v2069
                %v2071 = vld [vmem:[%s1919 + $0x12c] sm:$0xf]
                %2072 = vst [vmem:[%s1920 + $0x22c] sm:$0xf] %v2071
                %v2073 = vld [vmem:[%s1919 + $0x130] sm:$0xf]
                %2074 = vst [vmem:[%s1920 + $0x230] sm:$0xf] %v2073
                %v2075 = vld [vmem:[%s1919 + $0x134] sm:$0xf]
                %2076 = vst [vmem:[%s1920 + $0x234] sm:$0xf] %v2075
                %v2077 = vld [vmem:[%s1919 + $0x138] sm:$0xf]
                %2078 = vst [vmem:[%s1920 + $0x238] sm:$0xf] %v2077
                %v2079 = vld [vmem:[%s1919 + $0x13c] sm:$0xf]
                %2080 = vst [vmem:[%s1920 + $0x23c] sm:$0xf] %v2079
                %v2081 = vld [vmem:[%s1919 + $0x140] sm:$0xf]
                %2082 = vst [vmem:[%s1920 + $0x240] sm:$0xf] %v2081
                %v2083 = vld [vmem:[%s1919 + $0x144] sm:$0xf]
                %2084 = vst [vmem:[%s1920 + $0x244] sm:$0xf] %v2083
                %v2085 = vld [vmem:[%s1919 + $0x148] sm:$0xf]
                %2086 = vst [vmem:[%s1920 + $0x248] sm:$0xf] %v2085
                %v2087 = vld [vmem:[%s1919 + $0x14c] sm:$0xf]
                %2088 = vst [vmem:[%s1920 + $0x24c] sm:$0xf] %v2087
                %v2089 = vld [vmem:[%s1919 + $0x150] sm:$0xf]
                %2090 = vst [vmem:[%s1920 + $0x250] sm:$0xf] %v2089
                %v2091 = vld [vmem:[%s1919 + $0x154] sm:$0xf]
                %2092 = vst [vmem:[%s1920 + $0x254] sm:$0xf] %v2091
                %v2093 = vld [vmem:[%s1919 + $0x158] sm:$0xf]
                %2094 = vst [vmem:[%s1920 + $0x258] sm:$0xf] %v2093
                %v2095 = vld [vmem:[%s1919 + $0x15c] sm:$0xf]
                %2096 = vst [vmem:[%s1920 + $0x25c] sm:$0xf] %v2095
                %v2097 = vld [vmem:[%s1919 + $0x160] sm:$0xf]
                %2098 = vst [vmem:[%s1920 + $0x260] sm:$0xf] %v2097
                %v2099 = vld [vmem:[%s1919 + $0x164] sm:$0xf]
                %2100 = vst [vmem:[%s1920 + $0x264] sm:$0xf] %v2099
                %v2101 = vld [vmem:[%s1919 + $0x168] sm:$0xf]
                %2102 = vst [vmem:[%s1920 + $0x268] sm:$0xf] %v2101
                %v2103 = vld [vmem:[%s1919 + $0x16c] sm:$0xf]
                %2104 = vst [vmem:[%s1920 + $0x26c] sm:$0xf] %v2103
                %v2105 = vld [vmem:[%s1919 + $0x170] sm:$0xf]
                %2106 = vst [vmem:[%s1920 + $0x270] sm:$0xf] %v2105
                %v2107 = vld [vmem:[%s1919 + $0x174] sm:$0xf]
                %2108 = vst [vmem:[%s1920 + $0x274] sm:$0xf] %v2107
                %v2109 = vld [vmem:[%s1919 + $0x178] sm:$0xf]
                %2110 = vst [vmem:[%s1920 + $0x278] sm:$0xf] %v2109
                %v2111 = vld [vmem:[%s1919 + $0x17c] sm:$0xf]
                %2112 = vst [vmem:[%s1920 + $0x27c] sm:$0xf] %v2111
              $region69: #{tpu_custom_call.1} parent=63 // loop_footer
                %s1918 = sadd.s32 1, %s1914
              $region70: #{tpu_custom_call.1} parent=63 // loop_footer_branch
                %1913 = sbr.rel target = $region66
              $region71: #{tpu_custom_call.1} parent=63 // loop_exit
                _
            $region64: #{tpu_custom_call.1} parent=55 // pred_fallthru
              _
          $region56: #{tpu_custom_call.1} parent=51 // pred_fallthru
            _
          %2324 = vnop
        $region52: #{tpu_custom_call.1} parent=47 // pred_fallthru
          _
      $region48: #{tpu_custom_call.1} parent=5 // pred_fallthru
        _
      %p2325 = scmp.le.s32.totalorder 2, %s13
      // Predicated region
      $region90: #{tpu_custom_call.1} parent=5 // pred_check
        %p2326 = pneg %p2325
      $region91: #{tpu_custom_call.1} parent=5 // pred_check_branch
        %2328 = sbr.rel (%p2326) target = $region93
      $region92: #{tpu_custom_call.1} parent=5 // pred_region
        %s2329 = ssub.s32 %s13, 2
        // Predicated region
        $region94: #{tpu_custom_call.1} parent=92 // pred_check
          %p2330 = pneg %p194
        $region95: #{tpu_custom_call.1} parent=92 // pred_check_branch
          %2332 = sbr.rel (%p2330) target = $region97
        $region96: #{tpu_custom_call.1} parent=92 // pred_region
          %s2333 = sand.u32 %s179, 1
          %s2334 = sand.u32 %s179, 1
          %s2335 = smul.addr %s2334, 384
          %s2336 = scalar_lea.vmem [#allocation2], %s2335
        $region97: #{tpu_custom_call.1} parent=92 // pred_fallthru
          _
      $region93: #{tpu_custom_call.1} parent=5 // pred_fallthru
        _
    $region6: #{tpu_custom_call.1} parent=1 // loop_footer
      %s17 = sadd.s32 1, %s13
    $region7: #{tpu_custom_call.1} parent=1 // loop_footer_branch
      %12 = sbr.rel target = $region3
    $region8: #{tpu_custom_call.1} parent=1 // loop_exit
      _

</llo_original>
